<compile_context>
chip_gen: v7x
topology: tpu7x:2x2x1
jax: 0.10.0
libtpu: 0.0.40
codegen_flags: <defaults>
</compile_context>

<pallas_src>
import math

import jax
import jax.numpy as jnp
from jax.experimental import pallas as pl
from jax.experimental.pallas import tpu as pltpu

# ---------------- hyper-parameters (small, consistent with the module) -------
BATCH = 2
SEQ = 8
HIDDEN = 32
NUM_HEADS = 4
HEAD_DIM = HIDDEN // NUM_HEADS
FF = 4 * HIDDEN
LN_EPS = 1e-5

_INV_SQRT2 = 1.0 / math.sqrt(2.0)


def transformer_layer_kernel(
    x_ref,      # (B*S, H)   f32
    mask_ref,   # (B, 1, S)  f32  (1 = valid key position)
    wqkv_ref,   # (H, 3H)    bf16 (q columns pre-scaled by 1/sqrt(H/nh))
    wres_ref,   # (H, H)     bf16
    w1_ref,     # (H, FF)    bf16
    w2_ref,     # (FF, H)    bf16
    vec_ref,    # (8, FF)    f32  rows: bres,g1,beta1,bf1,bf2,g2,beta2,bqkv(scaled)
    o_ref,      # (B*S, H)   f32
):
    BS, H = x_ref.shape
    nh, hd, S = NUM_HEADS, HEAD_DIM, SEQ
    Bb = BS // S
    NB = nh * Bb
    f32, bf16 = jnp.float32, jnp.bfloat16

    x2d = x_ref[...]                                           # (BS, H) f32

    # ---------------- LocalAttentionLayer ----------------
    # Fused QKV projection: one (BS,H)@(H,3H) MXU pass (+ packed bias row).
    qkv = jnp.dot(x2d.astype(bf16), wqkv_ref[...],
                  preferred_element_type=f32) + vec_ref[7:8, :3 * H]   # (BS, 3H)

    # Head-major (NB, S, hd) views via static lane slices + major-axis concat.
    # Merged batch index n = h * Bb + b.
    def split_heads(base):
        return jnp.concatenate(
            [qkv[:, base + h * hd: base + (h + 1) * hd].reshape(Bb, S, hd)
             for h in range(nh)], axis=0).astype(bf16)                 # (NB, S, hd)

    q_nb = split_heads(0)
    k_nb = split_heads(H)
    v_nb = split_heads(2 * H)

    # attention scores (1/sqrt(H/nh) already folded into the Q projection)
    scores = jnp.einsum('nsd,ntd->nst', q_nb, k_nb,
                        preferred_element_type=f32)                    # (NB, S, S)

    # causal (tril) mask combined with the key-padding mask — boolean, broadcast
    row = jax.lax.broadcasted_iota(jnp.int32, (S, S), 0)
    col = jax.lax.broadcasted_iota(jnp.int32, (S, S), 1)
    causal = row >= col                                                # (S, S) bool
    kvalid = mask_ref[...].reshape(1, Bb, 1, S) > 0.0                  # (1,Bb,1,S) bool

    s4 = scores.reshape(nh, Bb, S, S)
    s4 = jnp.where(causal & kvalid, s4, -1e9)
    s4 = s4 - jnp.max(s4, axis=-1, keepdims=True)
    p4 = jnp.exp(s4)
    p4 = p4 * pl.reciprocal(jnp.sum(p4, axis=-1, keepdims=True), approx=True)
    # TODO(synk): att_drop is identity (eval-mode dropout).

    ctx = jnp.einsum('nst,ntd->nsd', p4.reshape(NB, S, S).astype(bf16), v_nb,
                     preferred_element_type=f32)                       # (NB, S, hd)

    # merge heads back to (BS, H); column order h*hd+d matches torch's flatten
    ctx2d = jnp.concatenate(
        [ctx[h * Bb:(h + 1) * Bb].reshape(BS, hd) for h in range(nh)], axis=1)

    # residual projection: single K=H matmul
    attn = jnp.dot(ctx2d.astype(bf16), wres_ref[...],
                   preferred_element_type=f32) + vec_ref[0:1, :H]      # (BS, H)
    # TODO(synk): res_drop is identity (eval-mode dropout).

    def layer_norm(y, g, b):
        u = jnp.mean(y, axis=-1, keepdims=True)
        s = jnp.mean(jnp.square(y - u), axis=-1, keepdims=True)
        return g * ((y - u) * jax.lax.rsqrt(s + LN_EPS)) + b

    # ---------------- residual + LayerNorm 1 ----------------
    h1 = layer_norm(x2d + attn, vec_ref[1:2, :H], vec_ref[2:3, :H])

    # ---------------- FeedForwardLayer (exact-erf GELU) ----------------
    a1 = jnp.dot(h1.astype(bf16), w1_ref[...],
                 preferred_element_type=f32) + vec_ref[3:4, :FF]
    x2 = 0.5 * a1 * (1.0 + jax.lax.erf(a1 * _INV_SQRT2))
    a2 = jnp.dot(x2.astype(bf16), w2_ref[...],
                 preferred_element_type=f32) + vec_ref[4:5, :H]

    # ---------------- residual + LayerNorm 2 ----------------
    o_ref[...] = layer_norm(h1 + a2, vec_ref[5:6, :H], vec_ref[6:7, :H])


def _pack_params(params):
    H, nh = HIDDEN, NUM_HEADS
    inv_scale = 1.0 / math.sqrt(H / nh)   # fold softmax scale into the Q projection

    wqkv = params["wqkv"]                                             # (H, 3H)
    wqkv = jnp.concatenate([wqkv[:, :H] * inv_scale, wqkv[:, H:]], axis=1)
    wqkv = wqkv.astype(jnp.bfloat16)

    bqkv = params["bqkv"].reshape(3 * H)
    bqkv = jnp.concatenate([bqkv[:H] * inv_scale, bqkv[H:]])          # (3H,) f32

    wres = params["wres"].astype(jnp.bfloat16)                        # (H, H)
    w1 = params["w1"].astype(jnp.bfloat16)                            # (H, FF)
    w2 = params["w2"].astype(jnp.bfloat16)                            # (FF, H)

    # pack all small row vectors into a single (8, FF) f32 operand (one vreg)
    vec = jnp.zeros((8, FF), jnp.float32)
    for i, name in enumerate(("bres", "g1", "beta1", "bf1", "bf2", "g2", "beta2")):
        rowv = params[name].reshape(-1)
        vec = vec.at[i, :rowv.shape[0]].set(rowv)
    vec = vec.at[7, :3 * H].set(bqkv)                                 # fused QKV bias
    return wqkv, wres, w1, w2, vec


def transformer_layer(x, seq_mask, params):
    """x: [B, S, H] f32, seq_mask: [B, S] f32 (0/1). Returns [B, S, H] f32."""
    B, S, H = x.shape
    x2d = x.reshape(B * S, H)
    mask3 = seq_mask.reshape(B, 1, S).astype(jnp.float32)
    wqkv, wres, w1, w2, vec = _pack_params(params)

    def full(shape):
        n = len(shape)
        return pl.BlockSpec(shape, lambda i: (0,) * n)

    out = pl.pallas_call(
        transformer_layer_kernel,
        out_shape=jax.ShapeDtypeStruct((B * S, H), jnp.float32),
        grid_spec=pltpu.PrefetchScalarGridSpec(
            num_scalar_prefetch=0,
            grid=(1,),                        # single invocation on all chips
            in_specs=[
                full((B * S, H)),             # x (flattened)
                full((B, 1, S)),              # key-validity mask
                full((H, 3 * H)),             # fused QKV weight (bf16, q pre-scaled)
                full((H, H)),                 # residual-proj weight (bf16)
                full((H, FF)),                # ffn linear 1 weight (bf16)
                full((FF, H)),                # ffn linear 2 weight (bf16)
                full((8, FF)),                # packed bias / LN / QKV-bias vectors
            ],
            out_specs=full((B * S, H)),
        ),
        compiler_params=pltpu.CompilerParams(
            dimension_semantics=("arbitrary",)),
    )(x2d, mask3, wqkv, wres, w1, w2, vec)
    return out.reshape(B, S, H)


def reference_transformer_layer(x, seq_mask, params):
    """Pure-JAX reference mirroring the PyTorch forward, for validation."""
    B, S, H = x.shape
    nh, hd = NUM_HEADS, HEAD_DIM
    qkv = x @ params["wqkv"] + params["bqkv"]
    q, k, v = qkv[..., :H], qkv[..., H:2 * H], qkv[..., 2 * H:]
    q = q.reshape(B, S, nh, hd).transpose(0, 2, 1, 3)
    k = k.reshape(B, S, nh, hd).transpose(0, 2, 3, 1)
    v = v.reshape(B, S, nh, hd).transpose(0, 2, 1, 3)
    att = (q @ k) / jnp.sqrt(jnp.float32(H) / nh)
    causal = jnp.tril(jnp.ones((S, S), jnp.float32))
    mask = causal[None, None] * seq_mask[:, None, None, :]
    att = att + (1.0 - mask) * (-1e9)
    prob = jax.nn.softmax(att, axis=-1)
    val = (prob @ v).transpose(0, 2, 1, 3).reshape(B, S, H)
    val = val @ params["wres"] + params["bres"]

    def ln(y, g, b):
        u = y.mean(-1, keepdims=True)
        s = ((y - u) ** 2).mean(-1, keepdims=True)
        return g * ((y - u) / jnp.sqrt(s + LN_EPS)) + b

    h1 = ln(x + val, params["g1"], params["beta1"])
    a1 = h1 @ params["w1"] + params["bf1"]
    x2 = 0.5 * a1 * (1.0 + jax.lax.erf(a1 / jnp.sqrt(2.0)))
    a2 = x2 @ params["w2"] + params["bf2"]
    return ln(h1 + a2, params["g2"], params["beta2"])


def init_params(key):
    ks = jax.random.split(key, 8)
    return {
        "wqkv": 0.02 * jax.random.normal(ks[0], (HIDDEN, 3 * HIDDEN), jnp.float32),
        "bqkv": 0.02 * jax.random.normal(ks[1], (1, 3 * HIDDEN), jnp.float32),
        "wres": 0.02 * jax.random.normal(ks[2], (HIDDEN, HIDDEN), jnp.float32),
        "bres": 0.02 * jax.random.normal(ks[3], (1, HIDDEN), jnp.float32),
        "g1": jnp.ones((1, HIDDEN), jnp.float32),
        "beta1": jnp.zeros((1, HIDDEN), jnp.float32),
        "w1": 0.02 * jax.random.normal(ks[4], (HIDDEN, FF), jnp.float32),
        "bf1": 0.02 * jax.random.normal(ks[5], (1, FF), jnp.float32),
        "w2": 0.02 * jax.random.normal(ks[6], (FF, HIDDEN), jnp.float32),
        "bf2": 0.02 * jax.random.normal(ks[7], (1, HIDDEN), jnp.float32),
        "g2": jnp.ones((1, HIDDEN), jnp.float32),
        "beta2": jnp.zeros((1, HIDDEN), jnp.float32),
    }


if __name__ == "__main__":
    key = jax.random.PRNGKey(0)
    kx, kp = jax.random.split(key)
    x = jax.random.normal(kx, (BATCH, SEQ, HIDDEN), jnp.float32)
    # seq 0: all positions valid; seq 1: last 2 positions are padding.
    seq_mask = jnp.stack([
        jnp.ones((SEQ,), jnp.float32),
        jnp.concatenate([jnp.ones((SEQ - 2,), jnp.float32),
                         jnp.zeros((2,), jnp.float32)]),
    ])
    params = init_params(kp)

    out = transformer_layer(x, seq_mask, params)
    out = jax.block_until_ready(out)

    ref = reference_transformer_layer(x, seq_mask, params)
    assert out.shape == (BATCH, SEQ, HIDDEN)
    assert jnp.allclose(out, ref, atol=5e-3, rtol=5e-3), "mismatch vs pure-JAX reference"

    print("KERNEL_OK")
</pallas_src>

<mosaic_0001>
module attributes {stable_mosaic.version = 11 : i64} {
  func.func @transformer_layer_kernel(%arg0: i32, %arg1: memref<16x32xf32, #tpu.memory_space<vmem>>, %arg2: memref<2x1x8xf32, #tpu.memory_space<vmem>>, %arg3: memref<32x96xbf16, #tpu.memory_space<vmem>>, %arg4: memref<32x32xbf16, #tpu.memory_space<vmem>>, %arg5: memref<32x128xbf16, #tpu.memory_space<vmem>>, %arg6: memref<128x32xbf16, #tpu.memory_space<vmem>>, %arg7: memref<8x128xf32, #tpu.memory_space<vmem>>, %arg8: memref<16x32xf32, #tpu.memory_space<vmem>>) attributes {dimension_semantics = [#tpu.dimension_semantics<arbitrary>], iteration_bounds = array<i64: 1>, scalar_prefetch = 0 : i64, scratch_operands = 0 : i64, tpu.core_type = #tpu.core_type<tc>, window_params = [{pipeline_mode = #tpu.pipeline_mode<synchronous>, transform_indices = @transform_0, window_bounds = array<i64: 16, 32>}, {pipeline_mode = #tpu.pipeline_mode<synchronous>, transform_indices = @transform_1, window_bounds = array<i64: 2, 1, 8>}, {pipeline_mode = #tpu.pipeline_mode<synchronous>, transform_indices = @transform_2, window_bounds = array<i64: 32, 96>}, {pipeline_mode = #tpu.pipeline_mode<synchronous>, transform_indices = @transform_3, window_bounds = array<i64: 32, 32>}, {pipeline_mode = #tpu.pipeline_mode<synchronous>, transform_indices = @transform_4, window_bounds = array<i64: 32, 128>}, {pipeline_mode = #tpu.pipeline_mode<synchronous>, transform_indices = @transform_5, window_bounds = array<i64: 128, 32>}, {pipeline_mode = #tpu.pipeline_mode<synchronous>, transform_indices = @transform_6, window_bounds = array<i64: 8, 128>}, {pipeline_mode = #tpu.pipeline_mode<synchronous>, transform_indices = @transform_7, window_bounds = array<i64: 16, 32>}]} {
    %c0 = arith.constant 0 : index
    %c0_0 = arith.constant 0 : index
    %0 = vector.load %arg1[%c0, %c0_0] : memref<16x32xf32, #tpu.memory_space<vmem>>, vector<16x32xf32>
    %1 = arith.truncf %0 : vector<16x32xf32> to vector<16x32xbf16>
    %c0_1 = arith.constant 0 : index
    %c0_2 = arith.constant 0 : index
    %2 = vector.load %arg3[%c0_1, %c0_2] : memref<32x96xbf16, #tpu.memory_space<vmem>>, vector<32x96xbf16>
    %cst = arith.constant dense<0.000000e+00> : vector<16x96xf32>
    %3 = tpu.matmul %1, %2, %cst {dimension_numbers = #tpu.dot_dimension_numbers<[1], [0], [0], [1], [0, 0, 1, 1], [], []>} : vector<16x32xbf16>, vector<32x96xbf16>, vector<16x96xf32> -> vector<16x96xf32>
    %c7 = arith.constant 7 : index
    %c0_3 = arith.constant 0 : index
    %4 = vector.load %arg7[%c7, %c0_3] : memref<8x128xf32, #tpu.memory_space<vmem>>, vector<1x96xf32>
    %5 = vector.broadcast %4 : vector<1x96xf32> to vector<16x96xf32>
    %6 = arith.addf %3, %5 : vector<16x96xf32>
    %7 = vector.extract_strided_slice %6 {offsets = [0, 0], sizes = [16, 8], strides = [1, 1]} : vector<16x96xf32> to vector<16x8xf32>
    %8 = vector.shape_cast %7 : vector<16x8xf32> to vector<2x8x8xf32>
    %9 = vector.extract_strided_slice %6 {offsets = [0, 8], sizes = [16, 8], strides = [1, 1]} : vector<16x96xf32> to vector<16x8xf32>
    %10 = vector.shape_cast %9 : vector<16x8xf32> to vector<2x8x8xf32>
    %11 = vector.extract_strided_slice %6 {offsets = [0, 16], sizes = [16, 8], strides = [1, 1]} : vector<16x96xf32> to vector<16x8xf32>
    %12 = vector.shape_cast %11 : vector<16x8xf32> to vector<2x8x8xf32>
    %13 = vector.extract_strided_slice %6 {offsets = [0, 24], sizes = [16, 8], strides = [1, 1]} : vector<16x96xf32> to vector<16x8xf32>
    %14 = vector.shape_cast %13 : vector<16x8xf32> to vector<2x8x8xf32>
    %15 = tpu.concatenate %8, %10, %12, %14 in 0 : vector<2x8x8xf32>, vector<2x8x8xf32>, vector<2x8x8xf32>, vector<2x8x8xf32> -> vector<8x8x8xf32>
    %16 = arith.truncf %15 : vector<8x8x8xf32> to vector<8x8x8xbf16>
    %17 = vector.extract_strided_slice %6 {offsets = [0, 32], sizes = [16, 8], strides = [1, 1]} : vector<16x96xf32> to vector<16x8xf32>
    %18 = vector.shape_cast %17 : vector<16x8xf32> to vector<2x8x8xf32>
    %19 = vector.extract_strided_slice %6 {offsets = [0, 40], sizes = [16, 8], strides = [1, 1]} : vector<16x96xf32> to vector<16x8xf32>
    %20 = vector.shape_cast %19 : vector<16x8xf32> to vector<2x8x8xf32>
    %21 = vector.extract_strided_slice %6 {offsets = [0, 48], sizes = [16, 8], strides = [1, 1]} : vector<16x96xf32> to vector<16x8xf32>
    %22 = vector.shape_cast %21 : vector<16x8xf32> to vector<2x8x8xf32>
    %23 = vector.extract_strided_slice %6 {offsets = [0, 56], sizes = [16, 8], strides = [1, 1]} : vector<16x96xf32> to vector<16x8xf32>
    %24 = vector.shape_cast %23 : vector<16x8xf32> to vector<2x8x8xf32>
    %25 = tpu.concatenate %18, %20, %22, %24 in 0 : vector<2x8x8xf32>, vector<2x8x8xf32>, vector<2x8x8xf32>, vector<2x8x8xf32> -> vector<8x8x8xf32>
    %26 = arith.truncf %25 : vector<8x8x8xf32> to vector<8x8x8xbf16>
    %27 = vector.extract_strided_slice %6 {offsets = [0, 64], sizes = [16, 8], strides = [1, 1]} : vector<16x96xf32> to vector<16x8xf32>
    %28 = vector.shape_cast %27 : vector<16x8xf32> to vector<2x8x8xf32>
    %29 = vector.extract_strided_slice %6 {offsets = [0, 72], sizes = [16, 8], strides = [1, 1]} : vector<16x96xf32> to vector<16x8xf32>
    %30 = vector.shape_cast %29 : vector<16x8xf32> to vector<2x8x8xf32>
    %31 = vector.extract_strided_slice %6 {offsets = [0, 80], sizes = [16, 8], strides = [1, 1]} : vector<16x96xf32> to vector<16x8xf32>
    %32 = vector.shape_cast %31 : vector<16x8xf32> to vector<2x8x8xf32>
    %33 = vector.extract_strided_slice %6 {offsets = [0, 88], sizes = [16, 8], strides = [1, 1]} : vector<16x96xf32> to vector<16x8xf32>
    %34 = vector.shape_cast %33 : vector<16x8xf32> to vector<2x8x8xf32>
    %35 = tpu.concatenate %28, %30, %32, %34 in 0 : vector<2x8x8xf32>, vector<2x8x8xf32>, vector<2x8x8xf32>, vector<2x8x8xf32> -> vector<8x8x8xf32>
    %36 = arith.truncf %35 : vector<8x8x8xf32> to vector<8x8x8xbf16>
    "tpu.trace_start"() <{level = 10 : i32, message = "nsd,ntd->nst"}> : () -> ()
    %cst_4 = arith.constant dense<0.000000e+00> : vector<8x8x8xf32>
    %37 = tpu.matmul %16, %26, %cst_4 {dimension_numbers = #tpu.dot_dimension_numbers<[2], [2], [1], [1], [0, 0, 0, 1, 1, 1], [0], [0]>} : vector<8x8x8xbf16>, vector<8x8x8xbf16>, vector<8x8x8xf32> -> vector<8x8x8xf32>
    "tpu.trace_stop"() : () -> ()
    %38 = tpu.iota {dimensions = array<i32: 0>} : vector<8x8xi32>
    %39 = tpu.iota {dimensions = array<i32: 1>} : vector<8x8xi32>
    %40 = arith.cmpi sge, %38, %39 : vector<8x8xi32>
    %c0_5 = arith.constant 0 : index
    %c0_6 = arith.constant 0 : index
    %c0_7 = arith.constant 0 : index
    %41 = vector.load %arg2[%c0_5, %c0_6, %c0_7] : memref<2x1x8xf32, #tpu.memory_space<vmem>>, vector<2x1x8xf32>
    %42 = vector.shape_cast %41 : vector<2x1x8xf32> to vector<1x2x1x8xf32>
    %cst_8 = arith.constant 0.000000e+00 : f32
    %43 = vector.broadcast %cst_8 : f32 to vector<1x2x1x8xf32>
    %44 = arith.cmpf ogt, %42, %43 : vector<1x2x1x8xf32>
    %45 = vector.shape_cast %37 : vector<8x8x8xf32> to vector<4x2x8x8xf32>
    %46 = vector.shape_cast %40 : vector<8x8xi1> to vector<1x1x8x8xi1>
    %47 = vector.broadcast %46 : vector<1x1x8x8xi1> to vector<1x2x8x8xi1>
    %48 = vector.broadcast %44 : vector<1x2x1x8xi1> to vector<1x2x8x8xi1>
    %49 = arith.andi %47, %48 : vector<1x2x8x8xi1>
    %cst_9 = arith.constant -1.000000e+09 : f32
    %50 = vector.shape_cast %49 : vector<1x2x8x8xi1> to vector<1x2x8x8xi1>
    %51 = vector.broadcast %50 : vector<1x2x8x8xi1> to vector<4x2x8x8xi1>
    %52 = vector.broadcast %cst_9 : f32 to vector<4x2x8x8xf32>
    %53 = arith.select %51, %45, %52 : vector<4x2x8x8xi1>, vector<4x2x8x8xf32>
    %cst_10 = arith.constant dense<0xFF800000> : vector<4x2x8xf32>
    %54 = vector.multi_reduction <maximumf>, %53, %cst_10 [3] : vector<4x2x8x8xf32> to vector<4x2x8xf32>
    %55 = vector.shape_cast %54 : vector<4x2x8xf32> to vector<4x2x8x1xf32>
    %56 = vector.broadcast %55 : vector<4x2x8x1xf32> to vector<4x2x8x8xf32>
    %57 = arith.subf %53, %56 : vector<4x2x8x8xf32>
    %58 = math.exp %57 : vector<4x2x8x8xf32>
    %cst_11 = arith.constant dense<0.000000e+00> : vector<4x2x8xf32>
    %59 = vector.multi_reduction <add>, %58, %cst_11 [3] : vector<4x2x8x8xf32> to vector<4x2x8xf32>
    %60 = vector.shape_cast %59 : vector<4x2x8xf32> to vector<4x2x8x1xf32>
    %61 = tpu.reciprocal %60 {approx = true} : vector<4x2x8x1xf32> -> vector<4x2x8x1xf32>
    %62 = vector.broadcast %61 : vector<4x2x8x1xf32> to vector<4x2x8x8xf32>
    %63 = arith.mulf %58, %62 : vector<4x2x8x8xf32>
    %64 = vector.shape_cast %63 : vector<4x2x8x8xf32> to vector<8x8x8xf32>
    %65 = arith.truncf %64 : vector<8x8x8xf32> to vector<8x8x8xbf16>
    "tpu.trace_start"() <{level = 10 : i32, message = "nst,ntd->nsd"}> : () -> ()
    %cst_12 = arith.constant dense<0.000000e+00> : vector<8x8x8xf32>
    %66 = tpu.matmul %65, %36, %cst_12 {dimension_numbers = #tpu.dot_dimension_numbers<[2], [1], [1], [2], [0, 0, 0, 1, 1, 2], [0], [0]>} : vector<8x8x8xbf16>, vector<8x8x8xbf16>, vector<8x8x8xf32> -> vector<8x8x8xf32>
    "tpu.trace_stop"() : () -> ()
    %67 = vector.extract_strided_slice %66 {offsets = [0, 0, 0], sizes = [2, 8, 8], strides = [1, 1, 1]} : vector<8x8x8xf32> to vector<2x8x8xf32>
    %68 = vector.shape_cast %67 : vector<2x8x8xf32> to vector<16x8xf32>
    %69 = vector.extract_strided_slice %66 {offsets = [2, 0, 0], sizes = [2, 8, 8], strides = [1, 1, 1]} : vector<8x8x8xf32> to vector<2x8x8xf32>
    %70 = vector.shape_cast %69 : vector<2x8x8xf32> to vector<16x8xf32>
    %71 = vector.extract_strided_slice %66 {offsets = [4, 0, 0], sizes = [2, 8, 8], strides = [1, 1, 1]} : vector<8x8x8xf32> to vector<2x8x8xf32>
    %72 = vector.shape_cast %71 : vector<2x8x8xf32> to vector<16x8xf32>
    %73 = vector.extract_strided_slice %66 {offsets = [6, 0, 0], sizes = [2, 8, 8], strides = [1, 1, 1]} : vector<8x8x8xf32> to vector<2x8x8xf32>
    %74 = vector.shape_cast %73 : vector<2x8x8xf32> to vector<16x8xf32>
    %75 = tpu.concatenate %68, %70, %72, %74 in 1 : vector<16x8xf32>, vector<16x8xf32>, vector<16x8xf32>, vector<16x8xf32> -> vector<16x32xf32>
    %76 = arith.truncf %75 : vector<16x32xf32> to vector<16x32xbf16>
    %c0_13 = arith.constant 0 : index
    %c0_14 = arith.constant 0 : index
    %77 = vector.load %arg4[%c0_13, %c0_14] : memref<32x32xbf16, #tpu.memory_space<vmem>>, vector<32x32xbf16>
    %cst_15 = arith.constant dense<0.000000e+00> : vector<16x32xf32>
    %78 = tpu.matmul %76, %77, %cst_15 {dimension_numbers = #tpu.dot_dimension_numbers<[1], [0], [0], [1], [0, 0, 1, 1], [], []>} : vector<16x32xbf16>, vector<32x32xbf16>, vector<16x32xf32> -> vector<16x32xf32>
    %c0_16 = arith.constant 0 : index
    %c0_17 = arith.constant 0 : index
    %79 = vector.load %arg7[%c0_16, %c0_17] : memref<8x128xf32, #tpu.memory_space<vmem>>, vector<1x32xf32>
    %80 = vector.broadcast %79 : vector<1x32xf32> to vector<16x32xf32>
    %81 = arith.addf %78, %80 : vector<16x32xf32>
    %82 = arith.addf %0, %81 : vector<16x32xf32>
    %c1 = arith.constant 1 : index
    %c0_18 = arith.constant 0 : index
    %83 = vector.load %arg7[%c1, %c0_18] : memref<8x128xf32, #tpu.memory_space<vmem>>, vector<1x32xf32>
    %c2 = arith.constant 2 : index
    %c0_19 = arith.constant 0 : index
    %84 = vector.load %arg7[%c2, %c0_19] : memref<8x128xf32, #tpu.memory_space<vmem>>, vector<1x32xf32>
    %cst_20 = arith.constant dense<0.000000e+00> : vector<16xf32>
    %85 = vector.multi_reduction <add>, %82, %cst_20 [1] : vector<16x32xf32> to vector<16xf32>
    %86 = vector.shape_cast %85 : vector<16xf32> to vector<16x1xf32>
    %cst_21 = arith.constant 3.200000e+01 : f32
    %87 = vector.broadcast %cst_21 : f32 to vector<16x1xf32>
    %88 = arith.divf %86, %87 : vector<16x1xf32>
    %89 = vector.broadcast %88 : vector<16x1xf32> to vector<16x32xf32>
    %90 = arith.subf %82, %89 : vector<16x32xf32>
    %91 = arith.mulf %90, %90 : vector<16x32xf32>
    %cst_22 = arith.constant dense<0.000000e+00> : vector<16xf32>
    %92 = vector.multi_reduction <add>, %91, %cst_22 [1] : vector<16x32xf32> to vector<16xf32>
    %93 = vector.shape_cast %92 : vector<16xf32> to vector<16x1xf32>
    %cst_23 = arith.constant 3.200000e+01 : f32
    %94 = vector.broadcast %cst_23 : f32 to vector<16x1xf32>
    %95 = arith.divf %93, %94 : vector<16x1xf32>
    %96 = vector.broadcast %88 : vector<16x1xf32> to vector<16x32xf32>
    %97 = arith.subf %82, %96 : vector<16x32xf32>
    %cst_24 = arith.constant 9.99999974E-6 : f32
    %98 = vector.broadcast %cst_24 : f32 to vector<16x1xf32>
    %99 = arith.addf %95, %98 : vector<16x1xf32>
    %100 = math.rsqrt %99 : vector<16x1xf32>
    %101 = vector.broadcast %100 : vector<16x1xf32> to vector<16x32xf32>
    %102 = arith.mulf %97, %101 : vector<16x32xf32>
    %103 = vector.broadcast %83 : vector<1x32xf32> to vector<16x32xf32>
    %104 = arith.mulf %103, %102 : vector<16x32xf32>
    %105 = vector.broadcast %84 : vector<1x32xf32> to vector<16x32xf32>
    %106 = arith.addf %104, %105 : vector<16x32xf32>
    %107 = arith.truncf %106 : vector<16x32xf32> to vector<16x32xbf16>
    %c0_25 = arith.constant 0 : index
    %c0_26 = arith.constant 0 : index
    %108 = vector.load %arg5[%c0_25, %c0_26] : memref<32x128xbf16, #tpu.memory_space<vmem>>, vector<32x128xbf16>
    %cst_27 = arith.constant dense<0.000000e+00> : vector<16x128xf32>
    %109 = tpu.matmul %107, %108, %cst_27 {dimension_numbers = #tpu.dot_dimension_numbers<[1], [0], [0], [1], [0, 0, 1, 1], [], []>} : vector<16x32xbf16>, vector<32x128xbf16>, vector<16x128xf32> -> vector<16x128xf32>
    %c3 = arith.constant 3 : index
    %c0_28 = arith.constant 0 : index
    %110 = vector.load %arg7[%c3, %c0_28] : memref<8x128xf32, #tpu.memory_space<vmem>>, vector<1x128xf32>
    %111 = vector.broadcast %110 : vector<1x128xf32> to vector<16x128xf32>
    %112 = arith.addf %109, %111 : vector<16x128xf32>
    %cst_29 = arith.constant 5.000000e-01 : f32
    %113 = vector.broadcast %cst_29 : f32 to vector<16x128xf32>
    %114 = arith.mulf %113, %112 : vector<16x128xf32>
    %cst_30 = arith.constant 0.707106769 : f32
    %115 = vector.broadcast %cst_30 : f32 to vector<16x128xf32>
    %116 = arith.mulf %112, %115 : vector<16x128xf32>
    %117 = math.erf %116 : vector<16x128xf32>
    %cst_31 = arith.constant 1.000000e+00 : f32
    %118 = vector.broadcast %cst_31 : f32 to vector<16x128xf32>
    %119 = arith.addf %118, %117 : vector<16x128xf32>
    %120 = arith.mulf %114, %119 : vector<16x128xf32>
    %121 = arith.truncf %120 : vector<16x128xf32> to vector<16x128xbf16>
    %c0_32 = arith.constant 0 : index
    %c0_33 = arith.constant 0 : index
    %122 = vector.load %arg6[%c0_32, %c0_33] : memref<128x32xbf16, #tpu.memory_space<vmem>>, vector<128x32xbf16>
    %cst_34 = arith.constant dense<0.000000e+00> : vector<16x32xf32>
    %123 = tpu.matmul %121, %122, %cst_34 {dimension_numbers = #tpu.dot_dimension_numbers<[1], [0], [0], [1], [0, 0, 1, 1], [], []>} : vector<16x128xbf16>, vector<128x32xbf16>, vector<16x32xf32> -> vector<16x32xf32>
    %c4 = arith.constant 4 : index
    %c0_35 = arith.constant 0 : index
    %124 = vector.load %arg7[%c4, %c0_35] : memref<8x128xf32, #tpu.memory_space<vmem>>, vector<1x32xf32>
    %125 = vector.broadcast %124 : vector<1x32xf32> to vector<16x32xf32>
    %126 = arith.addf %123, %125 : vector<16x32xf32>
    %127 = arith.addf %106, %126 : vector<16x32xf32>
    %c5 = arith.constant 5 : index
    %c0_36 = arith.constant 0 : index
    %128 = vector.load %arg7[%c5, %c0_36] : memref<8x128xf32, #tpu.memory_space<vmem>>, vector<1x32xf32>
    %c6 = arith.constant 6 : index
    %c0_37 = arith.constant 0 : index
    %129 = vector.load %arg7[%c6, %c0_37] : memref<8x128xf32, #tpu.memory_space<vmem>>, vector<1x32xf32>
    %cst_38 = arith.constant dense<0.000000e+00> : vector<16xf32>
    %130 = vector.multi_reduction <add>, %127, %cst_38 [1] : vector<16x32xf32> to vector<16xf32>
    %131 = vector.shape_cast %130 : vector<16xf32> to vector<16x1xf32>
    %cst_39 = arith.constant 3.200000e+01 : f32
    %132 = vector.broadcast %cst_39 : f32 to vector<16x1xf32>
    %133 = arith.divf %131, %132 : vector<16x1xf32>
    %134 = vector.broadcast %133 : vector<16x1xf32> to vector<16x32xf32>
    %135 = arith.subf %127, %134 : vector<16x32xf32>
    %136 = arith.mulf %135, %135 : vector<16x32xf32>
    %cst_40 = arith.constant dense<0.000000e+00> : vector<16xf32>
    %137 = vector.multi_reduction <add>, %136, %cst_40 [1] : vector<16x32xf32> to vector<16xf32>
    %138 = vector.shape_cast %137 : vector<16xf32> to vector<16x1xf32>
    %cst_41 = arith.constant 3.200000e+01 : f32
    %139 = vector.broadcast %cst_41 : f32 to vector<16x1xf32>
    %140 = arith.divf %138, %139 : vector<16x1xf32>
    %141 = vector.broadcast %133 : vector<16x1xf32> to vector<16x32xf32>
    %142 = arith.subf %127, %141 : vector<16x32xf32>
    %cst_42 = arith.constant 9.99999974E-6 : f32
    %143 = vector.broadcast %cst_42 : f32 to vector<16x1xf32>
    %144 = arith.addf %140, %143 : vector<16x1xf32>
    %145 = math.rsqrt %144 : vector<16x1xf32>
    %146 = vector.broadcast %145 : vector<16x1xf32> to vector<16x32xf32>
    %147 = arith.mulf %142, %146 : vector<16x32xf32>
    %148 = vector.broadcast %128 : vector<1x32xf32> to vector<16x32xf32>
    %149 = arith.mulf %148, %147 : vector<16x32xf32>
    %150 = vector.broadcast %129 : vector<1x32xf32> to vector<16x32xf32>
    %151 = arith.addf %149, %150 : vector<16x32xf32>
    %c0_43 = arith.constant 0 : index
    %c0_44 = arith.constant 0 : index
    %152 = vector.load %arg8[%c0_43, %c0_44] : memref<16x32xf32, #tpu.memory_space<vmem>>, vector<16x32xf32>
    tpu.vector_store %arg8[%c0_43, %c0_44], %151 {strides = array<i32>} : memref<16x32xf32, #tpu.memory_space<vmem>>, vector<16x32xf32>,
    return
  }
  func.func @transform_0(%arg0: i32) -> (i32, i32) {
    %c0_i32 = arith.constant 0 : i32
    %c0_i32_0 = arith.constant 0 : i32
    %c0_i32_1 = arith.constant 0 : i32
    return %c0_i32, %c0_i32_0 : i32, i32
  }
  func.func @transform_1(%arg0: i32) -> (i32, i32, i32) {
    %c0_i32 = arith.constant 0 : i32
    %c0_i32_0 = arith.constant 0 : i32
    %c0_i32_1 = arith.constant 0 : i32
    %c0_i32_2 = arith.constant 0 : i32
    return %c0_i32, %c0_i32_0, %c0_i32_1 : i32, i32, i32
  }
  func.func @transform_2(%arg0: i32) -> (i32, i32) {
    %c0_i32 = arith.constant 0 : i32
    %c0_i32_0 = arith.constant 0 : i32
    %c0_i32_1 = arith.constant 0 : i32
    return %c0_i32, %c0_i32_0 : i32, i32
  }
  func.func @transform_3(%arg0: i32) -> (i32, i32) {
    %c0_i32 = arith.constant 0 : i32
    %c0_i32_0 = arith.constant 0 : i32
    %c0_i32_1 = arith.constant 0 : i32
    return %c0_i32, %c0_i32_0 : i32, i32
  }
  func.func @transform_4(%arg0: i32) -> (i32, i32) {
    %c0_i32 = arith.constant 0 : i32
    %c0_i32_0 = arith.constant 0 : i32
    %c0_i32_1 = arith.constant 0 : i32
    return %c0_i32, %c0_i32_0 : i32, i32
  }
  func.func @transform_5(%arg0: i32) -> (i32, i32) {
    %c0_i32 = arith.constant 0 : i32
    %c0_i32_0 = arith.constant 0 : i32
    %c0_i32_1 = arith.constant 0 : i32
    return %c0_i32, %c0_i32_0 : i32, i32
  }
  func.func @transform_6(%arg0: i32) -> (i32, i32) {
    %c0_i32 = arith.constant 0 : i32
    %c0_i32_0 = arith.constant 0 : i32
    %c0_i32_1 = arith.constant 0 : i32
    return %c0_i32, %c0_i32_0 : i32, i32
  }
  func.func @transform_7(%arg0: i32) -> (i32, i32) {
    %c0_i32 = arith.constant 0 : i32
    %c0_i32_0 = arith.constant 0 : i32
    %c0_i32_1 = arith.constant 0 : i32
    return %c0_i32, %c0_i32_0 : i32, i32
  }
}

</mosaic_0001>

<llo_original>
// kernel: tpu_custom_call.1
$region0: #{tpu_custom_call.1}
  #allocation0 [shape = 'u32[]', space=smem, size = 0x4, offset = 0x4, fixed_abs, tag = 'smem constant byte address 0x4 - core index']
  #allocation1 [shape = 'u32[144,128]{1,0:T(1,128)}', space=vmem, size = 0x12000, scoped, tag = 'internal scratch']
  %s0 = inlined_call_operand.vmem [shape: f32[16,32], index: 0, kind: input, shape index: {}]
  %s1 = inlined_call_operand.vmem [shape: f32[2,1,8], index: 1, kind: input, shape index: {}]
  %s2 = inlined_call_operand.vmem [shape: bf16[32,96], index: 2, kind: input, shape index: {}]
  %s3 = inlined_call_operand.vmem [shape: bf16[32,32], index: 3, kind: input, shape index: {}]
  %s4 = inlined_call_operand.vmem [shape: bf16[32,128], index: 4, kind: input, shape index: {}]
  %s5 = inlined_call_operand.vmem [shape: bf16[128,32], index: 5, kind: input, shape index: {}]
  %s6 = inlined_call_operand.vmem [shape: f32[8,128], index: 6, kind: input, shape index: {}]
  %s7 = inlined_call_operand.hbm [shape: f32[16,32], index: 7, kind: output, shape index: {}]
  %s8 = sld [smem:[#allocation0]]
  $region38: #{tpu_custom_call.1} parent=0
    _
  %s10 = ssub.s32 1, %s8
  %s11 = scalar_select 0, %s10, %s8
  $region1: #{tpu_custom_call.1} parent=0
    #allocation2 [shape = 'u8[8192]{0}', space=vmem, size = 0x2000, scoped, tag = 'output window, operand 0, single buffered']
    #allocation3 [shape = 's32[1]{0}', space=sflag, size = 0x4, scoped, tag = 'scoped memory for tpu_custom_call.1']
    %12 = vsyncpa [#allocation3], 0
    // Predicated region
    $region2: #{tpu_custom_call.1} parent=1 // pred_check
      _
    $region3: #{tpu_custom_call.1} parent=1 // pred_check_branch
      %14 = sbr.rel (0) target = $region5
    $region4: #{tpu_custom_call.1} parent=1 // pred_region
      _
    $region5: #{tpu_custom_call.1} parent=1 // pred_fallthru
      _
    // Predicated region
    $region6: #{tpu_custom_call.1} parent=1 // pred_check
      _
    $region7: #{tpu_custom_call.1} parent=1 // pred_check_branch
      %16 = sbr.rel (0) target = $region9
    $region8: #{tpu_custom_call.1} parent=1 // pred_region
      _
    $region9: #{tpu_custom_call.1} parent=1 // pred_fallthru
      _
    // Predicated region
    $region10: #{tpu_custom_call.1} parent=1 // pred_check
      _
    $region11: #{tpu_custom_call.1} parent=1 // pred_check_branch
      %18 = sbr.rel (0) target = $region13
    $region12: #{tpu_custom_call.1} parent=1 // pred_region
      _
    $region13: #{tpu_custom_call.1} parent=1 // pred_fallthru
      _
    // Predicated region
    $region14: #{tpu_custom_call.1} parent=1 // pred_check
      _
    $region15: #{tpu_custom_call.1} parent=1 // pred_check_branch
      %20 = sbr.rel (0) target = $region17
    $region16: #{tpu_custom_call.1} parent=1 // pred_region
      _
    $region17: #{tpu_custom_call.1} parent=1 // pred_fallthru
      _
    // Predicated region
    $region18: #{tpu_custom_call.1} parent=1 // pred_check
      _
    $region19: #{tpu_custom_call.1} parent=1 // pred_check_branch
      %22 = sbr.rel (0) target = $region21
    $region20: #{tpu_custom_call.1} parent=1 // pred_region
      _
    $region21: #{tpu_custom_call.1} parent=1 // pred_fallthru
      _
    // Predicated region
    $region22: #{tpu_custom_call.1} parent=1 // pred_check
      _
    $region23: #{tpu_custom_call.1} parent=1 // pred_check_branch
      %24 = sbr.rel (0) target = $region25
    $region24: #{tpu_custom_call.1} parent=1 // pred_region
      _
    $region25: #{tpu_custom_call.1} parent=1 // pred_fallthru
      _
    // Predicated region
    $region26: #{tpu_custom_call.1} parent=1 // pred_check
      _
    $region27: #{tpu_custom_call.1} parent=1 // pred_check_branch
      %26 = sbr.rel (0) target = $region29
    $region28: #{tpu_custom_call.1} parent=1 // pred_region
      _
    $region29: #{tpu_custom_call.1} parent=1 // pred_fallthru
      _
    %v28 = vld [vmem:[%s0] sm:$0xff]
    %v29 = vld [vmem:[%s0 + $0x8] sm:$0xff]
    %v30 = vpack.c.bf16 %v29, %v28
    %v31 = vld [vmem:[%s2] sm:$0xf]
    %v32 = vld [vmem:[%s2 + $0x4] sm:$0xf]
    %v33 = vld [vmem:[%s2 + $0x8] sm:$0xf]
    %v34 = vld [vmem:[%s2 + $0xc] sm:$0xf]
    %v35 = vld [vmem:[%s6 + $0x7] sm:$0x1]
    %v36 = vlaneseq
    %v37 = vshrl.u32 %v36, 7
    %v38 = vsub.s32 0, %v37
    %v39 = vrot.slane %v35, %v38
    %v44 = vunpack.c.l.b16 %v31
    %v45 = vunpack.c.l.b16 %v32
    %v46 = vunpack.c.l.b16 %v33
    %v47 = vunpack.c.l.b16 %v34
    %v48 = vpack.c.b16 %v45, %v44
    %v49 = vpack.c.b16 %v47, %v46
    %vm52 = vcmask 261120
    %v54 = vsel %vm52, %v30, 0
    %56 = vmatprep.subr.bf16.mxu0 0
    %57 = vmatpush1.bf16.msra.mxu0 %v48
    %58 = vmatprep.subr.bf16.mxu0 0
    %59 = vmatpush1.bf16.msra.mxu0 %v49
    %60 = vmatprep.subr.bf16.mxu0 0
    %61 = vmatpush1.bf16.msra.mxu0 0
    %62 = vmatprep.subr.bf16.mxu0 0
    %63 = vmatpush1.bf16.msra.mxu0 0
    %64 = vmatprep.subr.bf16.mxu0 0
    %65 = vmatpush1.bf16.msra.mxu0 0
    %66 = vmatprep.subr.bf16.mxu0 0
    %67 = vmatpush1.bf16.msra.mxu0 0
    %68 = vmatprep.subr.bf16.mxu0 0
    %69 = vmatpush1.bf16.msra.mxu0 0
    %70 = vmatprep.subr.bf16.mxu0 0
    %71 = vmatpush1.bf16.msra.mxu0 0
    %72 = vmatprep.subr.bf16.mxu0 0
    %73 = vmatpush1.bf16.msra.mxu0 0
    %74 = vmatprep.subr.bf16.mxu0 0
    %75 = vmatpush1.bf16.msra.mxu0 0
    %76 = vmatprep.subr.bf16.mxu0 0
    %77 = vmatpush1.bf16.msra.mxu0 0
    %78 = vmatprep.subr.bf16.mxu0 0
    %79 = vmatpush1.bf16.msra.mxu0 0
    %80 = vmatprep.subr.bf16.mxu0 0
    %81 = vmatpush1.bf16.msra.mxu0 0
    %82 = vmatprep.subr.bf16.mxu0 0
    %83 = vmatpush1.bf16.msra.mxu0 0
    %84 = vmatprep.subr.bf16.mxu0 0
    %85 = vmatpush1.bf16.msra.mxu0 0
    %86 = vmatprep.subr.bf16.mxu0 0
    %87 = vmatpush1.bf16.msra.mxu0 0
    %88 = vmatprep.mubr.bf16.mxu0 0
    %89 = vmatmul.mubr.bf16.gmra.mrb[0].mxu0 %v54
    %v90 = vpop.f32.mrb[0].mxu0
    %v91 = vadd.f32 %v39, %v90
    %v92 = vpop.f32.mrb[0].mxu0
    %v93 = vpop.f32.mrb[0].mxu0
    %v94 = vadd.f32 %v39, %v93
    %v95 = vpop.f32.mrb[0].mxu0
    %96 = vdwg.mxu0
    %99 = vrot.lane.b32.xlu0 %v91, 120
    %v100 = vpop.permute.xlu0 %99
    %101 = vrot.lane.b32.xlu0 %v94, 120
    %v102 = vpop.permute.xlu0 %101
    %105 = vrot.lane.b32.xlu0 %v91, 112
    %v106 = vpop.permute.xlu0 %105
    %107 = vrot.lane.b32.xlu0 %v94, 112
    %v108 = vpop.permute.xlu0 %107
    %111 = vrot.lane.b32.xlu0 %v91, 104
    %v112 = vpop.permute.xlu0 %111
    %113 = vrot.lane.b32.xlu0 %v94, 104
    %v114 = vpop.permute.xlu0 %113
    %v117 = vpack.c.bf16 %v91, %v91
    %v118 = vpack.c.bf16 %v94, %v94
    %v119 = vpack.c.bf16 %v100, %v100
    %v120 = vpack.c.bf16 %v102, %v102
    %v121 = vpack.c.bf16 %v106, %v106
    %v122 = vpack.c.bf16 %v108, %v108
    %v123 = vpack.c.bf16 %v112, %v112
    %v124 = vpack.c.bf16 %v114, %v114
    %126 = vrot.lane.b32.xlu0 %v117, 96
    %v127 = vpop.permute.xlu0 %126
    %vm128 = vcmask 64512
    %v130 = vsel %vm128, %v117, 0
    %v133 = vsel %vm128, %v127, 0
    %135 = vmatprep.subr.bf16.mxu0 0
    %136 = vmatpush1.bf16.xpose.msra.mxu0 %v133
    %137 = vmatprep.subr.bf16.mxu0 0
    %138 = vmatpush1.bf16.xpose.msra.mxu0 0
    %139 = vmatprep.subr.bf16.mxu0 0
    %140 = vmatpush1.bf16.xpose.msra.mxu0 0
    %141 = vmatprep.subr.bf16.mxu0 0
    %142 = vmatpush1.bf16.xpose.msra.mxu0 0
    %143 = vmatprep.subr.bf16.mxu0 0
    %144 = vmatpush1.bf16.xpose.msra.mxu0 0
    %145 = vmatprep.subr.bf16.mxu0 0
    %146 = vmatpush1.bf16.xpose.msra.mxu0 0
    %147 = vmatprep.subr.bf16.mxu0 0
    %148 = vmatpush1.bf16.xpose.msra.mxu0 0
    %149 = vmatprep.subr.bf16.mxu0 0
    %150 = vmatpush1.bf16.xpose.msra.mxu0 0
    %151 = vmatprep.subr.bf16.mxu0 0
    %152 = vmatpush1.bf16.xpose.msra.mxu0 0
    %153 = vmatprep.subr.bf16.mxu0 0
    %154 = vmatpush1.bf16.xpose.msra.mxu0 0
    %155 = vmatprep.subr.bf16.mxu0 0
    %156 = vmatpush1.bf16.xpose.msra.mxu0 0
    %157 = vmatprep.subr.bf16.mxu0 0
    %158 = vmatpush1.bf16.xpose.msra.mxu0 0
    %159 = vmatprep.subr.bf16.mxu0 0
    %160 = vmatpush1.bf16.xpose.msra.mxu0 0
    %161 = vmatprep.subr.bf16.mxu0 0
    %162 = vmatpush1.bf16.xpose.msra.mxu0 0
    %163 = vmatprep.subr.bf16.mxu0 0
    %164 = vmatpush1.bf16.xpose.msra.mxu0 0
    %165 = vmatprep.subr.bf16.mxu0 0
    %166 = vmatpush1.bf16.xpose.msra.mxu0 0
    %167 = vmatprep.mubr.bf16.mxu0 0
    %168 = vmatmul.mubr.bf16.gmra.mrb[0].mxu0 %v130
    %v169 = vpop.f32.mrb[0].mxu0
    %v170 = vadd.f32 0.0, %v169
    %v171 = vpop.f32.mrb[0].mxu0
    %v172 = vpop.f32.mrb[0].mxu0
    %v173 = vpop.f32.mrb[0].mxu0
    %174 = vdwg.mxu0
    %176 = vrot.lane.b32.xlu0 %v118, 96
    %v177 = vpop.permute.xlu0 %176
    %v179 = vsel %vm128, %v118, 0
    %v182 = vsel %vm128, %v177, 0
    %184 = vmatprep.subr.bf16.mxu0 0
    %185 = vmatpush1.bf16.xpose.msra.mxu0 %v182
    %186 = vmatprep.subr.bf16.mxu0 0
    %187 = vmatpush1.bf16.xpose.msra.mxu0 0
    %188 = vmatprep.subr.bf16.mxu0 0
    %189 = vmatpush1.bf16.xpose.msra.mxu0 0
    %190 = vmatprep.subr.bf16.mxu0 0
    %191 = vmatpush1.bf16.xpose.msra.mxu0 0
    %192 = vmatprep.subr.bf16.mxu0 0
    %193 = vmatpush1.bf16.xpose.msra.mxu0 0
    %194 = vmatprep.subr.bf16.mxu0 0
    %195 = vmatpush1.bf16.xpose.msra.mxu0 0
    %196 = vmatprep.subr.bf16.mxu0 0
    %197 = vmatpush1.bf16.xpose.msra.mxu0 0
    %198 = vmatprep.subr.bf16.mxu0 0
    %199 = vmatpush1.bf16.xpose.msra.mxu0 0
    %200 = vmatprep.subr.bf16.mxu0 0
    %201 = vmatpush1.bf16.xpose.msra.mxu0 0
    %202 = vmatprep.subr.bf16.mxu0 0
    %203 = vmatpush1.bf16.xpose.msra.mxu0 0
    %204 = vmatprep.subr.bf16.mxu0 0
    %205 = vmatpush1.bf16.xpose.msra.mxu0 0
    %206 = vmatprep.subr.bf16.mxu0 0
    %207 = vmatpush1.bf16.xpose.msra.mxu0 0
    %208 = vmatprep.subr.bf16.mxu0 0
    %209 = vmatpush1.bf16.xpose.msra.mxu0 0
    %210 = vmatprep.subr.bf16.mxu0 0
    %211 = vmatpush1.bf16.xpose.msra.mxu0 0
    %212 = vmatprep.subr.bf16.mxu0 0
    %213 = vmatpush1.bf16.xpose.msra.mxu0 0
    %214 = vmatprep.subr.bf16.mxu0 0
    %215 = vmatpush1.bf16.xpose.msra.mxu0 0
    %216 = vmatprep.mubr.bf16.mxu0 0
    %217 = vmatmul.mubr.bf16.gmra.mrb[0].mxu0 %v179
    %v218 = vpop.f32.mrb[0].mxu0
    %v219 = vadd.f32 0.0, %v218
    %v220 = vpop.f32.mrb[0].mxu0
    %v221 = vpop.f32.mrb[0].mxu0
    %v222 = vpop.f32.mrb[0].mxu0
    %223 = vdwg.mxu0
    %225 = vrot.lane.b32.xlu0 %v119, 96
    %v226 = vpop.permute.xlu0 %225
    %v228 = vsel %vm128, %v119, 0
    %v231 = vsel %vm128, %v226, 0
    %233 = vmatprep.subr.bf16.mxu0 0
    %234 = vmatpush1.bf16.xpose.msra.mxu0 %v231
    %235 = vmatprep.subr.bf16.mxu0 0
    %236 = vmatpush1.bf16.xpose.msra.mxu0 0
    %237 = vmatprep.subr.bf16.mxu0 0
    %238 = vmatpush1.bf16.xpose.msra.mxu0 0
    %239 = vmatprep.subr.bf16.mxu0 0
    %240 = vmatpush1.bf16.xpose.msra.mxu0 0
    %241 = vmatprep.subr.bf16.mxu0 0
    %242 = vmatpush1.bf16.xpose.msra.mxu0 0
    %243 = vmatprep.subr.bf16.mxu0 0
    %244 = vmatpush1.bf16.xpose.msra.mxu0 0
    %245 = vmatprep.subr.bf16.mxu0 0
    %246 = vmatpush1.bf16.xpose.msra.mxu0 0
    %247 = vmatprep.subr.bf16.mxu0 0
    %248 = vmatpush1.bf16.xpose.msra.mxu0 0
    %249 = vmatprep.subr.bf16.mxu0 0
    %250 = vmatpush1.bf16.xpose.msra.mxu0 0
    %251 = vmatprep.subr.bf16.mxu0 0
    %252 = vmatpush1.bf16.xpose.msra.mxu0 0
    %253 = vmatprep.subr.bf16.mxu0 0
    %254 = vmatpush1.bf16.xpose.msra.mxu0 0
    %255 = vmatprep.subr.bf16.mxu0 0
    %256 = vmatpush1.bf16.xpose.msra.mxu0 0
    %257 = vmatprep.subr.bf16.mxu0 0
    %258 = vmatpush1.bf16.xpose.msra.mxu0 0
    %259 = vmatprep.subr.bf16.mxu0 0
    %260 = vmatpush1.bf16.xpose.msra.mxu0 0
    %261 = vmatprep.subr.bf16.mxu0 0
    %262 = vmatpush1.bf16.xpose.msra.mxu0 0
    %263 = vmatprep.subr.bf16.mxu0 0
    %264 = vmatpush1.bf16.xpose.msra.mxu0 0
    %265 = vmatprep.mubr.bf16.mxu0 0
    %266 = vmatmul.mubr.bf16.gmra.mrb[0].mxu0 %v228
    %v267 = vpop.f32.mrb[0].mxu0
    %v268 = vadd.f32 0.0, %v267
    %v269 = vpop.f32.mrb[0].mxu0
    %v270 = vpop.f32.mrb[0].mxu0
    %v271 = vpop.f32.mrb[0].mxu0
    %272 = vdwg.mxu0
    %274 = vrot.lane.b32.xlu0 %v120, 96
    %v275 = vpop.permute.xlu0 %274
    %v277 = vsel %vm128, %v120, 0
    %v280 = vsel %vm128, %v275, 0
    %282 = vmatprep.subr.bf16.mxu0 0
    %283 = vmatpush1.bf16.xpose.msra.mxu0 %v280
    %284 = vmatprep.subr.bf16.mxu0 0
    %285 = vmatpush1.bf16.xpose.msra.mxu0 0
    %286 = vmatprep.subr.bf16.mxu0 0
    %287 = vmatpush1.bf16.xpose.msra.mxu0 0
    %288 = vmatprep.subr.bf16.mxu0 0
    %289 = vmatpush1.bf16.xpose.msra.mxu0 0
    %290 = vmatprep.subr.bf16.mxu0 0
    %291 = vmatpush1.bf16.xpose.msra.mxu0 0
    %292 = vmatprep.subr.bf16.mxu0 0
    %293 = vmatpush1.bf16.xpose.msra.mxu0 0
    %294 = vmatprep.subr.bf16.mxu0 0
    %295 = vmatpush1.bf16.xpose.msra.mxu0 0
    %296 = vmatprep.subr.bf16.mxu0 0
    %297 = vmatpush1.bf16.xpose.msra.mxu0 0
    %298 = vmatprep.subr.bf16.mxu0 0
    %299 = vmatpush1.bf16.xpose.msra.mxu0 0
    %300 = vmatprep.subr.bf16.mxu0 0
    %301 = vmatpush1.bf16.xpose.msra.mxu0 0
    %302 = vmatprep.subr.bf16.mxu0 0
    %303 = vmatpush1.bf16.xpose.msra.mxu0 0
    %304 = vmatprep.subr.bf16.mxu0 0
    %305 = vmatpush1.bf16.xpose.msra.mxu0 0
    %306 = vmatprep.subr.bf16.mxu0 0
    %307 = vmatpush1.bf16.xpose.msra.mxu0 0
    %308 = vmatprep.subr.bf16.mxu0 0
    %309 = vmatpush1.bf16.xpose.msra.mxu0 0
    %310 = vmatprep.subr.bf16.mxu0 0
    %311 = vmatpush1.bf16.xpose.msra.mxu0 0
    %312 = vmatprep.subr.bf16.mxu0 0
    %313 = vmatpush1.bf16.xpose.msra.mxu0 0
    %314 = vmatprep.mubr.bf16.mxu0 0
    %315 = vmatmul.mubr.bf16.gmra.mrb[0].mxu0 %v277
    %v316 = vpop.f32.mrb[0].mxu0
    %v317 = vadd.f32 0.0, %v316
    %v318 = vpop.f32.mrb[0].mxu0
    %v319 = vpop.f32.mrb[0].mxu0
    %v320 = vpop.f32.mrb[0].mxu0
    %321 = vdwg.mxu0
    %323 = vrot.lane.b32.xlu0 %v121, 96
    %v324 = vpop.permute.xlu0 %323
    %v326 = vsel %vm128, %v121, 0
    %v329 = vsel %vm128, %v324, 0
    %331 = vmatprep.subr.bf16.mxu0 0
    %332 = vmatpush1.bf16.xpose.msra.mxu0 %v329
    %333 = vmatprep.subr.bf16.mxu0 0
    %334 = vmatpush1.bf16.xpose.msra.mxu0 0
    %335 = vmatprep.subr.bf16.mxu0 0
    %336 = vmatpush1.bf16.xpose.msra.mxu0 0
    %337 = vmatprep.subr.bf16.mxu0 0
    %338 = vmatpush1.bf16.xpose.msra.mxu0 0
    %339 = vmatprep.subr.bf16.mxu0 0
    %340 = vmatpush1.bf16.xpose.msra.mxu0 0
    %341 = vmatprep.subr.bf16.mxu0 0
    %342 = vmatpush1.bf16.xpose.msra.mxu0 0
    %343 = vmatprep.subr.bf16.mxu0 0
    %344 = vmatpush1.bf16.xpose.msra.mxu0 0
    %345 = vmatprep.subr.bf16.mxu0 0
    %346 = vmatpush1.bf16.xpose.msra.mxu0 0
    %347 = vmatprep.subr.bf16.mxu0 0
    %348 = vmatpush1.bf16.xpose.msra.mxu0 0
    %349 = vmatprep.subr.bf16.mxu0 0
    %350 = vmatpush1.bf16.xpose.msra.mxu0 0
    %351 = vmatprep.subr.bf16.mxu0 0
    %352 = vmatpush1.bf16.xpose.msra.mxu0 0
    %353 = vmatprep.subr.bf16.mxu0 0
    %354 = vmatpush1.bf16.xpose.msra.mxu0 0
    %355 = vmatprep.subr.bf16.mxu0 0
    %356 = vmatpush1.bf16.xpose.msra.mxu0 0
    %357 = vmatprep.subr.bf16.mxu0 0
    %358 = vmatpush1.bf16.xpose.msra.mxu0 0
    %359 = vmatprep.subr.bf16.mxu0 0
    %360 = vmatpush1.bf16.xpose.msra.mxu0 0
    %361 = vmatprep.subr.bf16.mxu0 0
    %362 = vmatpush1.bf16.xpose.msra.mxu0 0
    %363 = vmatprep.mubr.bf16.mxu0 0
    %364 = vmatmul.mubr.bf16.gmra.mrb[0].mxu0 %v326
    %v365 = vpop.f32.mrb[0].mxu0
    %v366 = vadd.f32 0.0, %v365
    %v367 = vpop.f32.mrb[0].mxu0
    %v368 = vpop.f32.mrb[0].mxu0
    %v369 = vpop.f32.mrb[0].mxu0
    %370 = vdwg.mxu0
    %372 = vrot.lane.b32.xlu0 %v122, 96
    %v373 = vpop.permute.xlu0 %372
    %v375 = vsel %vm128, %v122, 0
    %v378 = vsel %vm128, %v373, 0
    %380 = vmatprep.subr.bf16.mxu0 0
    %381 = vmatpush1.bf16.xpose.msra.mxu0 %v378
    %382 = vmatprep.subr.bf16.mxu0 0
    %383 = vmatpush1.bf16.xpose.msra.mxu0 0
    %384 = vmatprep.subr.bf16.mxu0 0
    %385 = vmatpush1.bf16.xpose.msra.mxu0 0
    %386 = vmatprep.subr.bf16.mxu0 0
    %387 = vmatpush1.bf16.xpose.msra.mxu0 0
    %388 = vmatprep.subr.bf16.mxu0 0
    %389 = vmatpush1.bf16.xpose.msra.mxu0 0
    %390 = vmatprep.subr.bf16.mxu0 0
    %391 = vmatpush1.bf16.xpose.msra.mxu0 0
    %392 = vmatprep.subr.bf16.mxu0 0
    %393 = vmatpush1.bf16.xpose.msra.mxu0 0
    %394 = vmatprep.subr.bf16.mxu0 0
    %395 = vmatpush1.bf16.xpose.msra.mxu0 0
    %396 = vmatprep.subr.bf16.mxu0 0
    %397 = vmatpush1.bf16.xpose.msra.mxu0 0
    %398 = vmatprep.subr.bf16.mxu0 0
    %399 = vmatpush1.bf16.xpose.msra.mxu0 0
    %400 = vmatprep.subr.bf16.mxu0 0
    %401 = vmatpush1.bf16.xpose.msra.mxu0 0
    %402 = vmatprep.subr.bf16.mxu0 0
    %403 = vmatpush1.bf16.xpose.msra.mxu0 0
    %404 = vmatprep.subr.bf16.mxu0 0
    %405 = vmatpush1.bf16.xpose.msra.mxu0 0
    %406 = vmatprep.subr.bf16.mxu0 0
    %407 = vmatpush1.bf16.xpose.msra.mxu0 0
    %408 = vmatprep.subr.bf16.mxu0 0
    %409 = vmatpush1.bf16.xpose.msra.mxu0 0
    %410 = vmatprep.subr.bf16.mxu0 0
    %411 = vmatpush1.bf16.xpose.msra.mxu0 0
    %412 = vmatprep.mubr.bf16.mxu0 0
    %413 = vmatmul.mubr.bf16.gmra.mrb[0].mxu0 %v375
    %v414 = vpop.f32.mrb[0].mxu0
    %v415 = vadd.f32 0.0, %v414
    %v416 = vpop.f32.mrb[0].mxu0
    %v417 = vpop.f32.mrb[0].mxu0
    %v418 = vpop.f32.mrb[0].mxu0
    %419 = vdwg.mxu0
    %421 = vrot.lane.b32.xlu0 %v123, 96
    %v422 = vpop.permute.xlu0 %421
    %v424 = vsel %vm128, %v123, 0
    %v427 = vsel %vm128, %v422, 0
    %429 = vmatprep.subr.bf16.mxu0 0
    %430 = vmatpush1.bf16.xpose.msra.mxu0 %v427
    %431 = vmatprep.subr.bf16.mxu0 0
    %432 = vmatpush1.bf16.xpose.msra.mxu0 0
    %433 = vmatprep.subr.bf16.mxu0 0
    %434 = vmatpush1.bf16.xpose.msra.mxu0 0
    %435 = vmatprep.subr.bf16.mxu0 0
    %436 = vmatpush1.bf16.xpose.msra.mxu0 0
    %437 = vmatprep.subr.bf16.mxu0 0
    %438 = vmatpush1.bf16.xpose.msra.mxu0 0
    %439 = vmatprep.subr.bf16.mxu0 0
    %440 = vmatpush1.bf16.xpose.msra.mxu0 0
    %441 = vmatprep.subr.bf16.mxu0 0
    %442 = vmatpush1.bf16.xpose.msra.mxu0 0
    %443 = vmatprep.subr.bf16.mxu0 0
    %444 = vmatpush1.bf16.xpose.msra.mxu0 0
    %445 = vmatprep.subr.bf16.mxu0 0
    %446 = vmatpush1.bf16.xpose.msra.mxu0 0
    %447 = vmatprep.subr.bf16.mxu0 0
    %448 = vmatpush1.bf16.xpose.msra.mxu0 0
    %449 = vmatprep.subr.bf16.mxu0 0
    %450 = vmatpush1.bf16.xpose.msra.mxu0 0
    %451 = vmatprep.subr.bf16.mxu0 0
    %452 = vmatpush1.bf16.xpose.msra.mxu0 0
    %453 = vmatprep.subr.bf16.mxu0 0
    %454 = vmatpush1.bf16.xpose.msra.mxu0 0
    %455 = vmatprep.subr.bf16.mxu0 0
    %456 = vmatpush1.bf16.xpose.msra.mxu0 0
    %457 = vmatprep.subr.bf16.mxu0 0
    %458 = vmatpush1.bf16.xpose.msra.mxu0 0
    %459 = vmatprep.subr.bf16.mxu0 0
    %460 = vmatpush1.bf16.xpose.msra.mxu0 0
    %461 = vmatprep.mubr.bf16.mxu0 0
    %462 = vmatmul.mubr.bf16.gmra.mrb[0].mxu0 %v424
    %v463 = vpop.f32.mrb[0].mxu0
    %v464 = vadd.f32 0.0, %v463
    %v465 = vpop.f32.mrb[0].mxu0
    %v466 = vpop.f32.mrb[0].mxu0
    %v467 = vpop.f32.mrb[0].mxu0
    %468 = vdwg.mxu0
    %470 = vrot.lane.b32.xlu0 %v124, 96
    %v471 = vpop.permute.xlu0 %470
    %v473 = vsel %vm128, %v124, 0
    %v476 = vsel %vm128, %v471, 0
    %478 = vmatprep.subr.bf16.mxu0 0
    %479 = vmatpush1.bf16.xpose.msra.mxu0 %v476
    %480 = vmatprep.subr.bf16.mxu0 0
    %481 = vmatpush1.bf16.xpose.msra.mxu0 0
    %482 = vmatprep.subr.bf16.mxu0 0
    %483 = vmatpush1.bf16.xpose.msra.mxu0 0
    %484 = vmatprep.subr.bf16.mxu0 0
    %485 = vmatpush1.bf16.xpose.msra.mxu0 0
    %486 = vmatprep.subr.bf16.mxu0 0
    %487 = vmatpush1.bf16.xpose.msra.mxu0 0
    %488 = vmatprep.subr.bf16.mxu0 0
    %489 = vmatpush1.bf16.xpose.msra.mxu0 0
    %490 = vmatprep.subr.bf16.mxu0 0
    %491 = vmatpush1.bf16.xpose.msra.mxu0 0
    %492 = vmatprep.subr.bf16.mxu0 0
    %493 = vmatpush1.bf16.xpose.msra.mxu0 0
    %494 = vmatprep.subr.bf16.mxu0 0
    %495 = vmatpush1.bf16.xpose.msra.mxu0 0
    %496 = vmatprep.subr.bf16.mxu0 0
    %497 = vmatpush1.bf16.xpose.msra.mxu0 0
    %498 = vmatprep.subr.bf16.mxu0 0
    %499 = vmatpush1.bf16.xpose.msra.mxu0 0
    %500 = vmatprep.subr.bf16.mxu0 0
    %501 = vmatpush1.bf16.xpose.msra.mxu0 0
    %502 = vmatprep.subr.bf16.mxu0 0
    %503 = vmatpush1.bf16.xpose.msra.mxu0 0
    %504 = vmatprep.subr.bf16.mxu0 0
    %505 = vmatpush1.bf16.xpose.msra.mxu0 0
    %506 = vmatprep.subr.bf16.mxu0 0
    %507 = vmatpush1.bf16.xpose.msra.mxu0 0
    %508 = vmatprep.subr.bf16.mxu0 0
    %509 = vmatpush1.bf16.xpose.msra.mxu0 0
    %510 = vmatprep.mubr.bf16.mxu0 0
    %511 = vmatmul.mubr.bf16.gmra.mrb[0].mxu0 %v473
    %v512 = vpop.f32.mrb[0].mxu0
    %v513 = vadd.f32 0.0, %v512
    %v514 = vpop.f32.mrb[0].mxu0
    %v515 = vpop.f32.mrb[0].mxu0
    %v516 = vpop.f32.mrb[0].mxu0
    %517 = vdwg.mxu0
    %v518 = vlaneseq
    %v519 = vshrl.u32 %v518, 7
    %v520 = vlaneseq
    %v521 = vand.u32 %v520, 127
    %vm522 = vcmp.ge.s32.totalorder %v519, %v521
    %v523 = vld [vmem:[%s1] sm:$0x1]
    %v524 = vld [vmem:[%s1 + $0x1] sm:$0x1]
    %vm525 = vcmp.gt.f32.partialorder %v523, 0.0
    %vm526 = vcmp.gt.f32.partialorder %v524, 0.0
    %v527 = vsel %vm522, 1, 0
    %vm528 = vcmp.eq.s32.totalorder %v527, 1
    %v529 = vsel %vm525, 1, 0
    %v530 = vsel %vm526, 1, 0
    %v531 = vlaneseq
    %v532 = vshrl.u32 %v531, 7
    %v533 = vsub.s32 0, %v532
    %v534 = vrot.slane %v529, %v533
    %v535 = vlaneseq
    %v536 = vshrl.u32 %v535, 7
    %v537 = vsub.s32 0, %v536
    %v538 = vrot.slane %v530, %v537
    %vm539 = vcmp.eq.s32.totalorder %v534, 1
    %vm540 = vcmp.eq.s32.totalorder %v538, 1
    %vm541 = vmand %vm528, %vm539
    %vm542 = vmand %vm528, %vm540
    %v543 = vsel %vm541, 1, 0
    %v544 = vsel %vm542, 1, 0
    %vm545 = vcmp.eq.s32.totalorder %v543, 1
    %vm546 = vcmp.eq.s32.totalorder %v544, 1
    %v547 = vsel %vm545, %v170, -1e+09
    %v548 = vsel %vm546, %v219, -1e+09
    %v549 = vsel %vm545, %v268, -1e+09
    %v550 = vsel %vm546, %v317, -1e+09
    %v551 = vsel %vm545, %v366, -1e+09
    %v552 = vsel %vm546, %v415, -1e+09
    %v553 = vsel %vm545, %v464, -1e+09
    %v554 = vsel %vm546, %v513, -1e+09
    %v555 = vsel %vm128, %v547, -inf
    %556 = vmax.xlane.f32.xlu0 %v555
    %v557 = vpop.xlane.xlu0 %556
    %v558 = vsel %vm128, %v548, -inf
    %559 = vmax.xlane.f32.xlu0 %v558
    %v560 = vpop.xlane.xlu0 %559
    %v561 = vsel %vm128, %v549, -inf
    %562 = vmax.xlane.f32.xlu0 %v561
    %v563 = vpop.xlane.xlu0 %562
    %v564 = vsel %vm128, %v550, -inf
    %565 = vmax.xlane.f32.xlu0 %v564
    %v566 = vpop.xlane.xlu0 %565
    %v567 = vsel %vm128, %v551, -inf
    %568 = vmax.xlane.f32.xlu0 %v567
    %v569 = vpop.xlane.xlu0 %568
    %v570 = vsel %vm128, %v552, -inf
    %571 = vmax.xlane.f32.xlu0 %v570
    %v572 = vpop.xlane.xlu0 %571
    %v573 = vsel %vm128, %v553, -inf
    %574 = vmax.xlane.f32.xlu0 %v573
    %v575 = vpop.xlane.xlu0 %574
    %v576 = vsel %vm128, %v554, -inf
    %577 = vmax.xlane.f32.xlu0 %v576
    %v578 = vpop.xlane.xlu0 %577
    %v579 = vsub.f32 %v547, %v557
    %v580 = vsub.f32 %v548, %v560
    %v581 = vsub.f32 %v549, %v563
    %v582 = vsub.f32 %v550, %v566
    %v583 = vsub.f32 %v551, %v569
    %v584 = vsub.f32 %v552, %v572
    %v585 = vsub.f32 %v553, %v575
    %v586 = vsub.f32 %v554, %v578
    %v587 = vmul.f32 %v579, 1.442695
    %v588 = vpow.pop %v587
    %v589 = vmul.f32 %v580, 1.442695
    %v590 = vpow.pop %v589
    %v591 = vmul.f32 %v581, 1.442695
    %v592 = vpow.pop %v591
    %v593 = vmul.f32 %v582, 1.442695
    %v594 = vpow.pop %v593
    %v595 = vmul.f32 %v583, 1.442695
    %v596 = vpow.pop %v595
    %v597 = vmul.f32 %v584, 1.442695
    %v598 = vpow.pop %v597
    %v599 = vmul.f32 %v585, 1.442695
    %v600 = vpow.pop %v599
    %v601 = vmul.f32 %v586, 1.442695
    %v602 = vpow.pop %v601
    %v603 = vsel %vm128, %v588, 0.0
    %604 = vadd.xlane.f32.xlu0 %v603
    %v605 = vpop.xlane.xlu0 %604
    %v606 = vsel %vm128, %v590, 0.0
    %607 = vadd.xlane.f32.xlu0 %v606
    %v608 = vpop.xlane.xlu0 %607
    %v609 = vsel %vm128, %v592, 0.0
    %610 = vadd.xlane.f32.xlu0 %v609
    %v611 = vpop.xlane.xlu0 %610
    %v612 = vsel %vm128, %v594, 0.0
    %613 = vadd.xlane.f32.xlu0 %v612
    %v614 = vpop.xlane.xlu0 %613
    %v615 = vsel %vm128, %v596, 0.0
    %616 = vadd.xlane.f32.xlu0 %v615
    %v617 = vpop.xlane.xlu0 %616
    %v618 = vsel %vm128, %v598, 0.0
    %619 = vadd.xlane.f32.xlu0 %v618
    %v620 = vpop.xlane.xlu0 %619
    %v621 = vsel %vm128, %v600, 0.0
    %622 = vadd.xlane.f32.xlu0 %v621
    %v623 = vpop.xlane.xlu0 %622
    %v624 = vsel %vm128, %v602, 0.0
    %625 = vadd.xlane.f32.xlu0 %v624
    %v626 = vpop.xlane.xlu0 %625
    %v627 = vrcp.pop %v605
    %v628 = vrcp.pop %v608
    %v629 = vrcp.pop %v611
    %v630 = vrcp.pop %v614
    %v631 = vrcp.pop %v617
    %v632 = vrcp.pop %v620
    %v633 = vrcp.pop %v623
    %v634 = vrcp.pop %v626
    %v635 = vmul.f32 %v588, %v627
    %v636 = vmul.f32 %v590, %v628
    %v637 = vmul.f32 %v592, %v629
    %v638 = vmul.f32 %v594, %v630
    %v639 = vmul.f32 %v596, %v631
    %v640 = vmul.f32 %v598, %v632
    %v641 = vmul.f32 %v600, %v633
    %v642 = vmul.f32 %v602, %v634
    %v643 = vpack.c.bf16 %v635, %v635
    %v644 = vpack.c.bf16 %v636, %v636
    %v645 = vpack.c.bf16 %v637, %v637
    %v646 = vpack.c.bf16 %v638, %v638
    %v647 = vpack.c.bf16 %v639, %v639
    %v648 = vpack.c.bf16 %v640, %v640
    %v649 = vpack.c.bf16 %v641, %v641
    %v650 = vpack.c.bf16 %v642, %v642
    %651 = vrot.lane.b32.xlu0 %v117, 64
    %v652 = vpop.permute.xlu0 %651
    %v654 = vsel %vm128, %v643, 0
    %vm656 = vcmask 1043456
    %v658 = vsel %vm656, %v652, 0
    %660 = vmatprep.subr.bf16.mxu0 0
    %661 = vmatpush1.bf16.msra.mxu0 %v658
    %662 = vmatprep.subr.bf16.mxu0 0
    %663 = vmatpush1.bf16.msra.mxu0 0
    %664 = vmatprep.subr.bf16.mxu0 0
    %665 = vmatpush1.bf16.msra.mxu0 0
    %666 = vmatprep.subr.bf16.mxu0 0
    %667 = vmatpush1.bf16.msra.mxu0 0
    %668 = vmatprep.subr.bf16.mxu0 0
    %669 = vmatpush1.bf16.msra.mxu0 0
    %670 = vmatprep.subr.bf16.mxu0 0
    %671 = vmatpush1.bf16.msra.mxu0 0
    %672 = vmatprep.subr.bf16.mxu0 0
    %673 = vmatpush1.bf16.msra.mxu0 0
    %674 = vmatprep.subr.bf16.mxu0 0
    %675 = vmatpush1.bf16.msra.mxu0 0
    %676 = vmatprep.subr.bf16.mxu0 0
    %677 = vmatpush1.bf16.msra.mxu0 0
    %678 = vmatprep.subr.bf16.mxu0 0
    %679 = vmatpush1.bf16.msra.mxu0 0
    %680 = vmatprep.subr.bf16.mxu0 0
    %681 = vmatpush1.bf16.msra.mxu0 0
    %682 = vmatprep.subr.bf16.mxu0 0
    %683 = vmatpush1.bf16.msra.mxu0 0
    %684 = vmatprep.subr.bf16.mxu0 0
    %685 = vmatpush1.bf16.msra.mxu0 0
    %686 = vmatprep.subr.bf16.mxu0 0
    %687 = vmatpush1.bf16.msra.mxu0 0
    %688 = vmatprep.subr.bf16.mxu0 0
    %689 = vmatpush1.bf16.msra.mxu0 0
    %690 = vmatprep.subr.bf16.mxu0 0
    %691 = vmatpush1.bf16.msra.mxu0 0
    %692 = vmatprep.mubr.bf16.mxu0 0
    %693 = vmatmul.mubr.bf16.gmra.mrb[0].mxu0 %v654
    %v694 = vpop.f32.mrb[0].mxu0
    %v695 = vadd.f32 0.0, %v694
    %v696 = vpop.f32.mrb[0].mxu0
    %v697 = vpop.f32.mrb[0].mxu0
    %v698 = vpop.f32.mrb[0].mxu0
    %699 = vdwg.mxu0
    %700 = vrot.lane.b32.xlu0 %v118, 64
    %v701 = vpop.permute.xlu0 %700
    %v703 = vsel %vm128, %v644, 0
    %v706 = vsel %vm656, %v701, 0
    %708 = vmatprep.subr.bf16.mxu0 0
    %709 = vmatpush1.bf16.msra.mxu0 %v706
    %710 = vmatprep.subr.bf16.mxu0 0
    %711 = vmatpush1.bf16.msra.mxu0 0
    %712 = vmatprep.subr.bf16.mxu0 0
    %713 = vmatpush1.bf16.msra.mxu0 0
    %714 = vmatprep.subr.bf16.mxu0 0
    %715 = vmatpush1.bf16.msra.mxu0 0
    %716 = vmatprep.subr.bf16.mxu0 0
    %717 = vmatpush1.bf16.msra.mxu0 0
    %718 = vmatprep.subr.bf16.mxu0 0
    %719 = vmatpush1.bf16.msra.mxu0 0
    %720 = vmatprep.subr.bf16.mxu0 0
    %721 = vmatpush1.bf16.msra.mxu0 0
    %722 = vmatprep.subr.bf16.mxu0 0
    %723 = vmatpush1.bf16.msra.mxu0 0
    %724 = vmatprep.subr.bf16.mxu0 0
    %725 = vmatpush1.bf16.msra.mxu0 0
    %726 = vmatprep.subr.bf16.mxu0 0
    %727 = vmatpush1.bf16.msra.mxu0 0
    %728 = vmatprep.subr.bf16.mxu0 0
    %729 = vmatpush1.bf16.msra.mxu0 0
    %730 = vmatprep.subr.bf16.mxu0 0
    %731 = vmatpush1.bf16.msra.mxu0 0
    %732 = vmatprep.subr.bf16.mxu0 0
    %733 = vmatpush1.bf16.msra.mxu0 0
    %734 = vmatprep.subr.bf16.mxu0 0
    %735 = vmatpush1.bf16.msra.mxu0 0
    %736 = vmatprep.subr.bf16.mxu0 0
    %737 = vmatpush1.bf16.msra.mxu0 0
    %738 = vmatprep.subr.bf16.mxu0 0
    %739 = vmatpush1.bf16.msra.mxu0 0
    %740 = vmatprep.mubr.bf16.mxu0 0
    %741 = vmatmul.mubr.bf16.gmra.mrb[0].mxu0 %v703
    %v742 = vpop.f32.mrb[0].mxu0
    %v743 = vadd.f32 0.0, %v742
    %v744 = vpop.f32.mrb[0].mxu0
    %v745 = vpop.f32.mrb[0].mxu0
    %v746 = vpop.f32.mrb[0].mxu0
    %747 = vdwg.mxu0
    %748 = vrot.lane.b32.xlu0 %v119, 64
    %v749 = vpop.permute.xlu0 %748
    %v751 = vsel %vm128, %v645, 0
    %v754 = vsel %vm656, %v749, 0
    %756 = vmatprep.subr.bf16.mxu0 0
    %757 = vmatpush1.bf16.msra.mxu0 %v754
    %758 = vmatprep.subr.bf16.mxu0 0
    %759 = vmatpush1.bf16.msra.mxu0 0
    %760 = vmatprep.subr.bf16.mxu0 0
    %761 = vmatpush1.bf16.msra.mxu0 0
    %762 = vmatprep.subr.bf16.mxu0 0
    %763 = vmatpush1.bf16.msra.mxu0 0
    %764 = vmatprep.subr.bf16.mxu0 0
    %765 = vmatpush1.bf16.msra.mxu0 0
    %766 = vmatprep.subr.bf16.mxu0 0
    %767 = vmatpush1.bf16.msra.mxu0 0
    %768 = vmatprep.subr.bf16.mxu0 0
    %769 = vmatpush1.bf16.msra.mxu0 0
    %770 = vmatprep.subr.bf16.mxu0 0
    %771 = vmatpush1.bf16.msra.mxu0 0
    %772 = vmatprep.subr.bf16.mxu0 0
    %773 = vmatpush1.bf16.msra.mxu0 0
    %774 = vmatprep.subr.bf16.mxu0 0
    %775 = vmatpush1.bf16.msra.mxu0 0
    %776 = vmatprep.subr.bf16.mxu0 0
    %777 = vmatpush1.bf16.msra.mxu0 0
    %778 = vmatprep.subr.bf16.mxu0 0
    %779 = vmatpush1.bf16.msra.mxu0 0
    %780 = vmatprep.subr.bf16.mxu0 0
    %781 = vmatpush1.bf16.msra.mxu0 0
    %782 = vmatprep.subr.bf16.mxu0 0
    %783 = vmatpush1.bf16.msra.mxu0 0
    %784 = vmatprep.subr.bf16.mxu0 0
    %785 = vmatpush1.bf16.msra.mxu0 0
    %786 = vmatprep.subr.bf16.mxu0 0
    %787 = vmatpush1.bf16.msra.mxu0 0
    %788 = vmatprep.mubr.bf16.mxu0 0
    %789 = vmatmul.mubr.bf16.gmra.mrb[0].mxu0 %v751
    %v790 = vpop.f32.mrb[0].mxu0
    %v791 = vadd.f32 0.0, %v790
    %v792 = vpop.f32.mrb[0].mxu0
    %v793 = vpop.f32.mrb[0].mxu0
    %v794 = vpop.f32.mrb[0].mxu0
    %795 = vdwg.mxu0
    %796 = vrot.lane.b32.xlu0 %v120, 64
    %v797 = vpop.permute.xlu0 %796
    %v799 = vsel %vm128, %v646, 0
    %v802 = vsel %vm656, %v797, 0
    %804 = vmatprep.subr.bf16.mxu0 0
    %805 = vmatpush1.bf16.msra.mxu0 %v802
    %806 = vmatprep.subr.bf16.mxu0 0
    %807 = vmatpush1.bf16.msra.mxu0 0
    %808 = vmatprep.subr.bf16.mxu0 0
    %809 = vmatpush1.bf16.msra.mxu0 0
    %810 = vmatprep.subr.bf16.mxu0 0
    %811 = vmatpush1.bf16.msra.mxu0 0
    %812 = vmatprep.subr.bf16.mxu0 0
    %813 = vmatpush1.bf16.msra.mxu0 0
    %814 = vmatprep.subr.bf16.mxu0 0
    %815 = vmatpush1.bf16.msra.mxu0 0
    %816 = vmatprep.subr.bf16.mxu0 0
    %817 = vmatpush1.bf16.msra.mxu0 0
    %818 = vmatprep.subr.bf16.mxu0 0
    %819 = vmatpush1.bf16.msra.mxu0 0
    %820 = vmatprep.subr.bf16.mxu0 0
    %821 = vmatpush1.bf16.msra.mxu0 0
    %822 = vmatprep.subr.bf16.mxu0 0
    %823 = vmatpush1.bf16.msra.mxu0 0
    %824 = vmatprep.subr.bf16.mxu0 0
    %825 = vmatpush1.bf16.msra.mxu0 0
    %826 = vmatprep.subr.bf16.mxu0 0
    %827 = vmatpush1.bf16.msra.mxu0 0
    %828 = vmatprep.subr.bf16.mxu0 0
    %829 = vmatpush1.bf16.msra.mxu0 0
    %830 = vmatprep.subr.bf16.mxu0 0
    %831 = vmatpush1.bf16.msra.mxu0 0
    %832 = vmatprep.subr.bf16.mxu0 0
    %833 = vmatpush1.bf16.msra.mxu0 0
    %834 = vmatprep.subr.bf16.mxu0 0
    %835 = vmatpush1.bf16.msra.mxu0 0
    %836 = vmatprep.mubr.bf16.mxu0 0
    %837 = vmatmul.mubr.bf16.gmra.mrb[0].mxu0 %v799
    %v838 = vpop.f32.mrb[0].mxu0
    %v839 = vadd.f32 0.0, %v838
    %v840 = vpop.f32.mrb[0].mxu0
    %v841 = vpop.f32.mrb[0].mxu0
    %v842 = vpop.f32.mrb[0].mxu0
    %843 = vdwg.mxu0
    %844 = vrot.lane.b32.xlu0 %v121, 64
    %v845 = vpop.permute.xlu0 %844
    %v847 = vsel %vm128, %v647, 0
    %v850 = vsel %vm656, %v845, 0
    %852 = vmatprep.subr.bf16.mxu0 0
    %853 = vmatpush1.bf16.msra.mxu0 %v850
    %854 = vmatprep.subr.bf16.mxu0 0
    %855 = vmatpush1.bf16.msra.mxu0 0
    %856 = vmatprep.subr.bf16.mxu0 0
    %857 = vmatpush1.bf16.msra.mxu0 0
    %858 = vmatprep.subr.bf16.mxu0 0
    %859 = vmatpush1.bf16.msra.mxu0 0
    %860 = vmatprep.subr.bf16.mxu0 0
    %861 = vmatpush1.bf16.msra.mxu0 0
    %862 = vmatprep.subr.bf16.mxu0 0
    %863 = vmatpush1.bf16.msra.mxu0 0
    %864 = vmatprep.subr.bf16.mxu0 0
    %865 = vmatpush1.bf16.msra.mxu0 0
    %866 = vmatprep.subr.bf16.mxu0 0
    %867 = vmatpush1.bf16.msra.mxu0 0
    %868 = vmatprep.subr.bf16.mxu0 0
    %869 = vmatpush1.bf16.msra.mxu0 0
    %870 = vmatprep.subr.bf16.mxu0 0
    %871 = vmatpush1.bf16.msra.mxu0 0
    %872 = vmatprep.subr.bf16.mxu0 0
    %873 = vmatpush1.bf16.msra.mxu0 0
    %874 = vmatprep.subr.bf16.mxu0 0
    %875 = vmatpush1.bf16.msra.mxu0 0
    %876 = vmatprep.subr.bf16.mxu0 0
    %877 = vmatpush1.bf16.msra.mxu0 0
    %878 = vmatprep.subr.bf16.mxu0 0
    %879 = vmatpush1.bf16.msra.mxu0 0
    %880 = vmatprep.subr.bf16.mxu0 0
    %881 = vmatpush1.bf16.msra.mxu0 0
    %882 = vmatprep.subr.bf16.mxu0 0
    %883 = vmatpush1.bf16.msra.mxu0 0
    %884 = vmatprep.mubr.bf16.mxu0 0
    %885 = vmatmul.mubr.bf16.gmra.mrb[0].mxu0 %v847
    %v886 = vpop.f32.mrb[0].mxu0
    %v887 = vadd.f32 0.0, %v886
    %v888 = vpop.f32.mrb[0].mxu0
    %v889 = vpop.f32.mrb[0].mxu0
    %v890 = vpop.f32.mrb[0].mxu0
    %891 = vdwg.mxu0
    %892 = vrot.lane.b32.xlu0 %v122, 64
    %v893 = vpop.permute.xlu0 %892
    %v895 = vsel %vm128, %v648, 0
    %v898 = vsel %vm656, %v893, 0
    %900 = vmatprep.subr.bf16.mxu0 0
    %901 = vmatpush1.bf16.msra.mxu0 %v898
    %902 = vmatprep.subr.bf16.mxu0 0
    %903 = vmatpush1.bf16.msra.mxu0 0
    %904 = vmatprep.subr.bf16.mxu0 0
    %905 = vmatpush1.bf16.msra.mxu0 0
    %906 = vmatprep.subr.bf16.mxu0 0
    %907 = vmatpush1.bf16.msra.mxu0 0
    %908 = vmatprep.subr.bf16.mxu0 0
    %909 = vmatpush1.bf16.msra.mxu0 0
    %910 = vmatprep.subr.bf16.mxu0 0
    %911 = vmatpush1.bf16.msra.mxu0 0
    %912 = vmatprep.subr.bf16.mxu0 0
    %913 = vmatpush1.bf16.msra.mxu0 0
    %914 = vmatprep.subr.bf16.mxu0 0
    %915 = vmatpush1.bf16.msra.mxu0 0
    %916 = vmatprep.subr.bf16.mxu0 0
    %917 = vmatpush1.bf16.msra.mxu0 0
    %918 = vmatprep.subr.bf16.mxu0 0
    %919 = vmatpush1.bf16.msra.mxu0 0
    %920 = vmatprep.subr.bf16.mxu0 0
    %921 = vmatpush1.bf16.msra.mxu0 0
    %922 = vmatprep.subr.bf16.mxu0 0
    %923 = vmatpush1.bf16.msra.mxu0 0
    %924 = vmatprep.subr.bf16.mxu0 0
    %925 = vmatpush1.bf16.msra.mxu0 0
    %926 = vmatprep.subr.bf16.mxu0 0
    %927 = vmatpush1.bf16.msra.mxu0 0
    %928 = vmatprep.subr.bf16.mxu0 0
    %929 = vmatpush1.bf16.msra.mxu0 0
    %930 = vmatprep.subr.bf16.mxu0 0
    %931 = vmatpush1.bf16.msra.mxu0 0
    %932 = vmatprep.mubr.bf16.mxu0 0
    %933 = vmatmul.mubr.bf16.gmra.mrb[0].mxu0 %v895
    %v934 = vpop.f32.mrb[0].mxu0
    %v935 = vadd.f32 0.0, %v934
    %v936 = vpop.f32.mrb[0].mxu0
    %v937 = vpop.f32.mrb[0].mxu0
    %v938 = vpop.f32.mrb[0].mxu0
    %939 = vdwg.mxu0
    %940 = vrot.lane.b32.xlu0 %v123, 64
    %v941 = vpop.permute.xlu0 %940
    %v943 = vsel %vm128, %v649, 0
    %v946 = vsel %vm656, %v941, 0
    %948 = vmatprep.subr.bf16.mxu0 0
    %949 = vmatpush1.bf16.msra.mxu0 %v946
    %950 = vmatprep.subr.bf16.mxu0 0
    %951 = vmatpush1.bf16.msra.mxu0 0
    %952 = vmatprep.subr.bf16.mxu0 0
    %953 = vmatpush1.bf16.msra.mxu0 0
    %954 = vmatprep.subr.bf16.mxu0 0
    %955 = vmatpush1.bf16.msra.mxu0 0
    %956 = vmatprep.subr.bf16.mxu0 0
    %957 = vmatpush1.bf16.msra.mxu0 0
    %958 = vmatprep.subr.bf16.mxu0 0
    %959 = vmatpush1.bf16.msra.mxu0 0
    %960 = vmatprep.subr.bf16.mxu0 0
    %961 = vmatpush1.bf16.msra.mxu0 0
    %962 = vmatprep.subr.bf16.mxu0 0
    %963 = vmatpush1.bf16.msra.mxu0 0
    %964 = vmatprep.subr.bf16.mxu0 0
    %965 = vmatpush1.bf16.msra.mxu0 0
    %966 = vmatprep.subr.bf16.mxu0 0
    %967 = vmatpush1.bf16.msra.mxu0 0
    %968 = vmatprep.subr.bf16.mxu0 0
    %969 = vmatpush1.bf16.msra.mxu0 0
    %970 = vmatprep.subr.bf16.mxu0 0
    %971 = vmatpush1.bf16.msra.mxu0 0
    %972 = vmatprep.subr.bf16.mxu0 0
    %973 = vmatpush1.bf16.msra.mxu0 0
    %974 = vmatprep.subr.bf16.mxu0 0
    %975 = vmatpush1.bf16.msra.mxu0 0
    %976 = vmatprep.subr.bf16.mxu0 0
    %977 = vmatpush1.bf16.msra.mxu0 0
    %978 = vmatprep.subr.bf16.mxu0 0
    %979 = vmatpush1.bf16.msra.mxu0 0
    %980 = vmatprep.mubr.bf16.mxu0 0
    %981 = vmatmul.mubr.bf16.gmra.mrb[0].mxu0 %v943
    %v982 = vpop.f32.mrb[0].mxu0
    %v983 = vadd.f32 0.0, %v982
    %v984 = vpop.f32.mrb[0].mxu0
    %v985 = vpop.f32.mrb[0].mxu0
    %v986 = vpop.f32.mrb[0].mxu0
    %987 = vdwg.mxu0
    %988 = vrot.lane.b32.xlu0 %v124, 64
    %v989 = vpop.permute.xlu0 %988
    %v991 = vsel %vm128, %v650, 0
    %v994 = vsel %vm656, %v989, 0
    %996 = vmatprep.subr.bf16.mxu0 0
    %997 = vmatpush1.bf16.msra.mxu0 %v994
    %998 = vmatprep.subr.bf16.mxu0 0
    %999 = vmatpush1.bf16.msra.mxu0 0
    %1000 = vmatprep.subr.bf16.mxu0 0
    %1001 = vmatpush1.bf16.msra.mxu0 0
    %1002 = vmatprep.subr.bf16.mxu0 0
    %1003 = vmatpush1.bf16.msra.mxu0 0
    %1004 = vmatprep.subr.bf16.mxu0 0
    %1005 = vmatpush1.bf16.msra.mxu0 0
    %1006 = vmatprep.subr.bf16.mxu0 0
    %1007 = vmatpush1.bf16.msra.mxu0 0
    %1008 = vmatprep.subr.bf16.mxu0 0
    %1009 = vmatpush1.bf16.msra.mxu0 0
    %1010 = vmatprep.subr.bf16.mxu0 0
    %1011 = vmatpush1.bf16.msra.mxu0 0
    %1012 = vmatprep.subr.bf16.mxu0 0
    %1013 = vmatpush1.bf16.msra.mxu0 0
    %1014 = vmatprep.subr.bf16.mxu0 0
    %1015 = vmatpush1.bf16.msra.mxu0 0
    %1016 = vmatprep.subr.bf16.mxu0 0
    %1017 = vmatpush1.bf16.msra.mxu0 0
    %1018 = vmatprep.subr.bf16.mxu0 0
    %1019 = vmatpush1.bf16.msra.mxu0 0
    %1020 = vmatprep.subr.bf16.mxu0 0
    %1021 = vmatpush1.bf16.msra.mxu0 0
    %1022 = vmatprep.subr.bf16.mxu0 0
    %1023 = vmatpush1.bf16.msra.mxu0 0
    %1024 = vmatprep.subr.bf16.mxu0 0
    %1025 = vmatpush1.bf16.msra.mxu0 0
    %1026 = vmatprep.subr.bf16.mxu0 0
    %1027 = vmatpush1.bf16.msra.mxu0 0
    %1028 = vmatprep.mubr.bf16.mxu0 0
    %1029 = vmatmul.mubr.bf16.gmra.mrb[0].mxu0 %v991
    %v1030 = vpop.f32.mrb[0].mxu0
    %v1031 = vadd.f32 0.0, %v1030
    %v1032 = vpop.f32.mrb[0].mxu0
    %v1033 = vpop.f32.mrb[0].mxu0
    %v1034 = vpop.f32.mrb[0].mxu0
    %1035 = vdwg.mxu0
    %1038 = vrot.lane.b32.xlu0 %v791, 8
    %v1039 = vpop.permute.xlu0 %1038
    %1040 = vrot.lane.b32.xlu0 %v839, 8
    %v1041 = vpop.permute.xlu0 %1040
    %1046 = vrot.lane.b32.xlu0 %v887, 16
    %v1047 = vpop.permute.xlu0 %1046
    %1048 = vrot.lane.b32.xlu0 %v935, 16
    %v1049 = vpop.permute.xlu0 %1048
    %1054 = vrot.lane.b32.xlu0 %v983, 24
    %v1055 = vpop.permute.xlu0 %1054
    %1056 = vrot.lane.b32.xlu0 %v1031, 24
    %v1057 = vpop.permute.xlu0 %1056
    %v1060 = vsel %vm128, %v695, %v1039
    %v1061 = vsel %vm128, %v743, %v1041
    %vm1062 = vcmask 130048
    %v1063 = vsel %vm1062, %v1060, %v1047
    %v1064 = vsel %vm1062, %v1061, %v1049
    %vm1065 = vcmask 195584
    %v1066 = vsel %vm1065, %v1063, %v1055
    %v1067 = vsel %vm1065, %v1064, %v1057
    %v1068 = vpack.c.bf16 %v1067, %v1066
    %v1069 = vld [vmem:[%s3] sm:$0xf]
    %v1070 = vld [vmem:[%s3 + $0x4] sm:$0xf]
    %v1071 = vld [vmem:[%s3 + $0x8] sm:$0xf]
    %v1072 = vld [vmem:[%s3 + $0xc] sm:$0xf]
    %v1073 = vld [vmem:[%s6] sm:$0x1]
    %v1074 = vlaneseq
    %v1075 = vshrl.u32 %v1074, 7
    %v1076 = vsub.s32 0, %v1075
    %v1077 = vrot.slane %v1073, %v1076
    %v1082 = vunpack.c.l.b16 %v1069
    %v1083 = vunpack.c.l.b16 %v1070
    %v1084 = vunpack.c.l.b16 %v1071
    %v1085 = vunpack.c.l.b16 %v1072
    %v1086 = vpack.c.b16 %v1083, %v1082
    %v1087 = vpack.c.b16 %v1085, %v1084
    %v1091 = vsel %vm52, %v1068, 0
    %1093 = vmatprep.subr.bf16.mxu0 0
    %1094 = vmatpush1.bf16.msra.mxu0 %v1086
    %1095 = vmatprep.subr.bf16.mxu0 0
    %1096 = vmatpush1.bf16.msra.mxu0 %v1087
    %1097 = vmatprep.subr.bf16.mxu0 0
    %1098 = vmatpush1.bf16.msra.mxu0 0
    %1099 = vmatprep.subr.bf16.mxu0 0
    %1100 = vmatpush1.bf16.msra.mxu0 0
    %1101 = vmatprep.subr.bf16.mxu0 0
    %1102 = vmatpush1.bf16.msra.mxu0 0
    %1103 = vmatprep.subr.bf16.mxu0 0
    %1104 = vmatpush1.bf16.msra.mxu0 0
    %1105 = vmatprep.subr.bf16.mxu0 0
    %1106 = vmatpush1.bf16.msra.mxu0 0
    %1107 = vmatprep.subr.bf16.mxu0 0
    %1108 = vmatpush1.bf16.msra.mxu0 0
    %1109 = vmatprep.subr.bf16.mxu0 0
    %1110 = vmatpush1.bf16.msra.mxu0 0
    %1111 = vmatprep.subr.bf16.mxu0 0
    %1112 = vmatpush1.bf16.msra.mxu0 0
    %1113 = vmatprep.subr.bf16.mxu0 0
    %1114 = vmatpush1.bf16.msra.mxu0 0
    %1115 = vmatprep.subr.bf16.mxu0 0
    %1116 = vmatpush1.bf16.msra.mxu0 0
    %1117 = vmatprep.subr.bf16.mxu0 0
    %1118 = vmatpush1.bf16.msra.mxu0 0
    %1119 = vmatprep.subr.bf16.mxu0 0
    %1120 = vmatpush1.bf16.msra.mxu0 0
    %1121 = vmatprep.subr.bf16.mxu0 0
    %1122 = vmatpush1.bf16.msra.mxu0 0
    %1123 = vmatprep.subr.bf16.mxu0 0
    %1124 = vmatpush1.bf16.msra.mxu0 0
    %1125 = vmatprep.mubr.bf16.mxu0 0
    %1126 = vmatmul.mubr.bf16.gmra.mrb[0].mxu0 %v1091
    %v1127 = vpop.f32.mrb[0].mxu0
    %v1128 = vadd.f32 %v1077, %v1127
    %v1129 = vpop.f32.mrb[0].mxu0
    %v1130 = vpop.f32.mrb[0].mxu0
    %v1131 = vadd.f32 %v1077, %v1130
    %v1132 = vpop.f32.mrb[0].mxu0
    %1133 = vdwg.mxu0
    %v1134 = vadd.f32 %v28, %v1128
    %v1135 = vadd.f32 %v29, %v1131
    %v1136 = vld [vmem:[%s6 + $0x1] sm:$0x1]
    %v1137 = vld [vmem:[%s6 + $0x2] sm:$0x1]
    %v1138 = vsel %vm52, %v1134, 0.0
    %1139 = vadd.xlane.f32.xlu0 %v1138
    %v1140 = vpop.xlane.xlu0 %1139
    %v1141 = vsel %vm52, %v1135, 0.0
    %1142 = vadd.xlane.f32.xlu0 %v1141
    %v1143 = vpop.xlane.xlu0 %1142
    %v1144 = vrcp.pop 32.0
    %v1145 = vmul.f32 %v1140, %v1144
    %v1146 = vmul.f32 %v1143, %v1144
    %v1147 = vsub.f32 %v1134, %v1145
    %v1148 = vsub.f32 %v1135, %v1146
    %v1149 = vmul.f32 %v1147, %v1147
    %v1150 = vmul.f32 %v1148, %v1148
    %v1151 = vsel %vm52, %v1149, 0.0
    %1152 = vadd.xlane.f32.xlu0 %v1151
    %v1153 = vpop.xlane.xlu0 %1152
    %v1154 = vsel %vm52, %v1150, 0.0
    %1155 = vadd.xlane.f32.xlu0 %v1154
    %v1156 = vpop.xlane.xlu0 %1155
    %v1157 = vmul.f32 %v1153, %v1144
    %v1158 = vmul.f32 %v1156, %v1144
    %v1159 = vadd.f32 %v1157, 1e-05
    %v1160 = vadd.f32 %v1158, 1e-05
    %v1161 = vrsqrt.pop %v1159
    %v1162 = vrsqrt.pop %v1160
    %v1163 = vmul.f32 %v1147, %v1161
    %v1164 = vmul.f32 %v1148, %v1162
    %v1165 = vlaneseq
    %v1166 = vshrl.u32 %v1165, 7
    %v1167 = vsub.s32 0, %v1166
    %v1168 = vrot.slane %v1136, %v1167
    %v1169 = vmul.f32 %v1168, %v1163
    %v1170 = vmul.f32 %v1168, %v1164
    %v1171 = vlaneseq
    %v1172 = vshrl.u32 %v1171, 7
    %v1173 = vsub.s32 0, %v1172
    %v1174 = vrot.slane %v1137, %v1173
    %v1175 = vadd.f32 %v1169, %v1174
    %v1176 = vadd.f32 %v1170, %v1174
    %v1177 = vpack.c.bf16 %v1176, %v1175
    %v1178 = vld [vmem:[%s4] sm:$0xf]
    %v1179 = vld [vmem:[%s4 + $0x4] sm:$0xf]
    %v1180 = vld [vmem:[%s4 + $0x8] sm:$0xf]
    %v1181 = vld [vmem:[%s4 + $0xc] sm:$0xf]
    %v1182 = vld [vmem:[%s6 + $0x3] sm:$0x1]
    %v1183 = vlaneseq
    %v1184 = vshrl.u32 %v1183, 7
    %v1185 = vsub.s32 0, %v1184
    %v1186 = vrot.slane %v1182, %v1185
    %v1191 = vunpack.c.l.b16 %v1178
    %v1192 = vunpack.c.l.b16 %v1179
    %v1193 = vunpack.c.l.b16 %v1180
    %v1194 = vunpack.c.l.b16 %v1181
    %v1195 = vpack.c.b16 %v1192, %v1191
    %v1196 = vpack.c.b16 %v1194, %v1193
    %v1200 = vsel %vm52, %v1177, 0
    %1202 = vmatprep.subr.bf16.mxu0 0
    %1203 = vmatpush1.bf16.msra.mxu0 %v1195
    %1204 = vmatprep.subr.bf16.mxu0 0
    %1205 = vmatpush1.bf16.msra.mxu0 %v1196
    %1206 = vmatprep.subr.bf16.mxu0 0
    %1207 = vmatpush1.bf16.msra.mxu0 0
    %1208 = vmatprep.subr.bf16.mxu0 0
    %1209 = vmatpush1.bf16.msra.mxu0 0
    %1210 = vmatprep.subr.bf16.mxu0 0
    %1211 = vmatpush1.bf16.msra.mxu0 0
    %1212 = vmatprep.subr.bf16.mxu0 0
    %1213 = vmatpush1.bf16.msra.mxu0 0
    %1214 = vmatprep.subr.bf16.mxu0 0
    %1215 = vmatpush1.bf16.msra.mxu0 0
    %1216 = vmatprep.subr.bf16.mxu0 0
    %1217 = vmatpush1.bf16.msra.mxu0 0
    %1218 = vmatprep.subr.bf16.mxu0 0
    %1219 = vmatpush1.bf16.msra.mxu0 0
    %1220 = vmatprep.subr.bf16.mxu0 0
    %1221 = vmatpush1.bf16.msra.mxu0 0
    %1222 = vmatprep.subr.bf16.mxu0 0
    %1223 = vmatpush1.bf16.msra.mxu0 0
    %1224 = vmatprep.subr.bf16.mxu0 0
    %1225 = vmatpush1.bf16.msra.mxu0 0
    %1226 = vmatprep.subr.bf16.mxu0 0
    %1227 = vmatpush1.bf16.msra.mxu0 0
    %1228 = vmatprep.subr.bf16.mxu0 0
    %1229 = vmatpush1.bf16.msra.mxu0 0
    %1230 = vmatprep.subr.bf16.mxu0 0
    %1231 = vmatpush1.bf16.msra.mxu0 0
    %1232 = vmatprep.subr.bf16.mxu0 0
    %1233 = vmatpush1.bf16.msra.mxu0 0
    %1234 = vmatprep.mubr.bf16.mxu0 0
    %1235 = vmatmul.mubr.bf16.gmra.mrb[0].mxu0 %v1200
    %v1236 = vpop.f32.mrb[0].mxu0
    %v1237 = vadd.f32 %v1186, %v1236
    %v1238 = vpop.f32.mrb[0].mxu0
    %v1239 = vpop.f32.mrb[0].mxu0
    %v1240 = vadd.f32 %v1186, %v1239
    %v1241 = vpop.f32.mrb[0].mxu0
    %1242 = vdwg.mxu0
    %v1243 = vmul.f32 %v1237, 0.5
    %v1244 = vmul.f32 %v1240, 0.5
    %v1245 = vmul.f32 %v1237, 0.70710677
    %v1246 = vmul.f32 %v1240, 0.70710677
    %v1247 = verf.f32.pop %v1245
    %v1248 = verf.f32.pop %v1246
    %v1249 = vadd.f32 %v1247, 1.0
    %v1250 = vadd.f32 %v1248, 1.0
    %v1251 = vmul.f32 %v1243, %v1249
    %v1252 = vmul.f32 %v1244, %v1250
    %v1253 = vpack.c.bf16 %v1252, %v1251
    %v1254 = vld [vmem:[%s5] sm:$0xf]
    %v1255 = vld [vmem:[%s5 + $0x4] sm:$0xf]
    %v1256 = vld [vmem:[%s5 + $0x8] sm:$0xf]
    %v1257 = vld [vmem:[%s5 + $0xc] sm:$0xf]
    %v1258 = vld [vmem:[%s5 + $0x10] sm:$0xf]
    %v1259 = vld [vmem:[%s5 + $0x14] sm:$0xf]
    %v1260 = vld [vmem:[%s5 + $0x18] sm:$0xf]
    %v1261 = vld [vmem:[%s5 + $0x1c] sm:$0xf]
    %v1262 = vld [vmem:[%s5 + $0x20] sm:$0xf]
    %v1263 = vld [vmem:[%s5 + $0x24] sm:$0xf]
    %v1264 = vld [vmem:[%s5 + $0x28] sm:$0xf]
    %v1265 = vld [vmem:[%s5 + $0x2c] sm:$0xf]
    %v1266 = vld [vmem:[%s5 + $0x30] sm:$0xf]
    %v1267 = vld [vmem:[%s5 + $0x34] sm:$0xf]
    %v1268 = vld [vmem:[%s5 + $0x38] sm:$0xf]
    %v1269 = vld [vmem:[%s5 + $0x3c] sm:$0xf]
    %v1270 = vld [vmem:[%s6 + $0x4] sm:$0x1]
    %v1271 = vlaneseq
    %v1272 = vshrl.u32 %v1271, 7
    %v1273 = vsub.s32 0, %v1272
    %v1274 = vrot.slane %v1270, %v1273
    %v1291 = vunpack.c.l.b16 %v1254
    %v1292 = vunpack.c.l.b16 %v1255
    %v1293 = vunpack.c.l.b16 %v1256
    %v1294 = vunpack.c.l.b16 %v1257
    %v1295 = vunpack.c.l.b16 %v1258
    %v1296 = vunpack.c.l.b16 %v1259
    %v1297 = vunpack.c.l.b16 %v1260
    %v1298 = vunpack.c.l.b16 %v1261
    %v1299 = vunpack.c.l.b16 %v1262
    %v1300 = vunpack.c.l.b16 %v1263
    %v1301 = vunpack.c.l.b16 %v1264
    %v1302 = vunpack.c.l.b16 %v1265
    %v1303 = vunpack.c.l.b16 %v1266
    %v1304 = vunpack.c.l.b16 %v1267
    %v1305 = vunpack.c.l.b16 %v1268
    %v1306 = vunpack.c.l.b16 %v1269
    %v1307 = vpack.c.b16 %v1292, %v1291
    %v1308 = vpack.c.b16 %v1294, %v1293
    %v1309 = vpack.c.b16 %v1296, %v1295
    %v1310 = vpack.c.b16 %v1298, %v1297
    %v1311 = vpack.c.b16 %v1300, %v1299
    %v1312 = vpack.c.b16 %v1302, %v1301
    %v1313 = vpack.c.b16 %v1304, %v1303
    %v1314 = vpack.c.b16 %v1306, %v1305
    %1323 = vmatprep.subr.bf16.mxu0 0
    %1324 = vmatpush1.bf16.msra.mxu0 %v1307
    %1325 = vmatprep.subr.bf16.mxu0 0
    %1326 = vmatpush1.bf16.msra.mxu0 %v1308
    %1327 = vmatprep.subr.bf16.mxu0 0
    %1328 = vmatpush1.bf16.msra.mxu0 %v1309
    %1329 = vmatprep.subr.bf16.mxu0 0
    %1330 = vmatpush1.bf16.msra.mxu0 %v1310
    %1331 = vmatprep.subr.bf16.mxu0 0
    %1332 = vmatpush1.bf16.msra.mxu0 %v1311
    %1333 = vmatprep.subr.bf16.mxu0 0
    %1334 = vmatpush1.bf16.msra.mxu0 %v1312
    %1335 = vmatprep.subr.bf16.mxu0 0
    %1336 = vmatpush1.bf16.msra.mxu0 %v1313
    %1337 = vmatprep.subr.bf16.mxu0 0
    %1338 = vmatpush1.bf16.msra.mxu0 %v1314
    %1339 = vmatprep.subr.bf16.mxu0 0
    %1340 = vmatpush1.bf16.msra.mxu0 0
    %1341 = vmatprep.subr.bf16.mxu0 0
    %1342 = vmatpush1.bf16.msra.mxu0 0
    %1343 = vmatprep.subr.bf16.mxu0 0
    %1344 = vmatpush1.bf16.msra.mxu0 0
    %1345 = vmatprep.subr.bf16.mxu0 0
    %1346 = vmatpush1.bf16.msra.mxu0 0
    %1347 = vmatprep.subr.bf16.mxu0 0
    %1348 = vmatpush1.bf16.msra.mxu0 0
    %1349 = vmatprep.subr.bf16.mxu0 0
    %1350 = vmatpush1.bf16.msra.mxu0 0
    %1351 = vmatprep.subr.bf16.mxu0 0
    %1352 = vmatpush1.bf16.msra.mxu0 0
    %1353 = vmatprep.subr.bf16.mxu0 0
    %1354 = vmatpush1.bf16.msra.mxu0 0
    %1355 = vmatprep.mubr.bf16.mxu0 0
    %1356 = vmatmul.mubr.bf16.gmra.mrb[0].mxu0 %v1253
    %v1357 = vpop.f32.mrb[0].mxu0
    %v1358 = vadd.f32 %v1274, %v1357
    %v1359 = vpop.f32.mrb[0].mxu0
    %v1360 = vpop.f32.mrb[0].mxu0
    %v1361 = vadd.f32 %v1274, %v1360
    %v1362 = vpop.f32.mrb[0].mxu0
    %1363 = vdwg.mxu0
    %v1364 = vadd.f32 %v1175, %v1358
    %v1365 = vadd.f32 %v1176, %v1361
    %v1366 = vld [vmem:[%s6 + $0x5] sm:$0x1]
    %v1367 = vld [vmem:[%s6 + $0x6] sm:$0x1]
    %v1368 = vsel %vm52, %v1364, 0.0
    %1369 = vadd.xlane.f32.xlu0 %v1368
    %v1370 = vpop.xlane.xlu0 %1369
    %v1371 = vsel %vm52, %v1365, 0.0
    %1372 = vadd.xlane.f32.xlu0 %v1371
    %v1373 = vpop.xlane.xlu0 %1372
    %v1374 = vmul.f32 %v1370, %v1144
    %v1375 = vmul.f32 %v1373, %v1144
    %v1376 = vsub.f32 %v1364, %v1374
    %v1377 = vsub.f32 %v1365, %v1375
    %v1378 = vmul.f32 %v1376, %v1376
    %v1379 = vmul.f32 %v1377, %v1377
    %v1380 = vsel %vm52, %v1378, 0.0
    %1381 = vadd.xlane.f32.xlu0 %v1380
    %v1382 = vpop.xlane.xlu0 %1381
    %v1383 = vsel %vm52, %v1379, 0.0
    %1384 = vadd.xlane.f32.xlu0 %v1383
    %v1385 = vpop.xlane.xlu0 %1384
    %v1386 = vmul.f32 %v1382, %v1144
    %v1387 = vmul.f32 %v1385, %v1144
    %v1388 = vadd.f32 %v1386, 1e-05
    %v1389 = vadd.f32 %v1387, 1e-05
    %v1390 = vrsqrt.pop %v1388
    %v1391 = vrsqrt.pop %v1389
    %v1392 = vmul.f32 %v1376, %v1390
    %v1393 = vmul.f32 %v1377, %v1391
    %v1394 = vlaneseq
    %v1395 = vshrl.u32 %v1394, 7
    %v1396 = vsub.s32 0, %v1395
    %v1397 = vrot.slane %v1366, %v1396
    %v1398 = vmul.f32 %v1397, %v1392
    %v1399 = vmul.f32 %v1397, %v1393
    %v1400 = vlaneseq
    %v1401 = vshrl.u32 %v1400, 7
    %v1402 = vsub.s32 0, %v1401
    %v1403 = vrot.slane %v1367, %v1402
    %v1404 = vadd.f32 %v1398, %v1403
    %v1405 = vadd.f32 %v1399, %v1403
    %1406 = vst.msk [vmem:[#allocation2] sm:$0xff] %vm52, %v1404
    %1407 = vst.msk [vmem:[#allocation2 + $0x8] sm:$0xff] %vm52, %v1405
    // Predicated region
    $region30: #{tpu_custom_call.1} parent=1 // pred_check
      _
    $region31: #{tpu_custom_call.1} parent=1 // pred_check_branch
      %1409 = sbr.rel (0) target = $region33
    $region32: #{tpu_custom_call.1} parent=1 // pred_region
      %s1411 = ssub.s32 256, 256
      %1412 = vsyncadd [#allocation3], %s1411
      %s1413 = sshll.u32 [#allocation2], 4
      %s1414 = int_to_ptr.vmem [resolvable:$true] %s1413
      %1419 = dma.vmem_to_hbm [thread:$0]  %s1414, 256, %s7, [#allocation3], 128, 128, 8
    $region33: #{tpu_custom_call.1} parent=1 // pred_fallthru
      _
    // Predicated region
    $region34: #{tpu_custom_call.1} parent=1 // pred_check
      _
    $region35: #{tpu_custom_call.1} parent=1 // pred_check_branch
      %1421 = sbr.rel (0) target = $region37
    $region36: #{tpu_custom_call.1} parent=1 // pred_region
      %1422 = dma.done [#allocation3], 256
    $region37: #{tpu_custom_call.1} parent=1 // pred_fallthru
      _
    %1423 = vsyncpa [#allocation3], 1

</llo_original>
